<compile_context>
chip_gen: v6e
topology: v6e:2x2x1
jax: 0.10.0
libtpu: 0.0.40
codegen_flags: <defaults>
</compile_context>

<pallas_src>
import jax
import jax.numpy as jnp
from jax.experimental import pallas as pl
from jax.experimental.pallas import tpu as pltpu

INPUT_DIM = 28 * 28                    # 784: multiple of 8 sublanes, no K padding needed
HIDDEN = (200, 170, 140, 90, 50)
OUTPUT_DIM = 10

P_HIDDEN = (256, 256, 256, 128, 128)   # lane-padded hidden widths
P_OUT = 128                            # lane-padded logits width
MAX_TB = 1024                          # batch-tile cap (sweepable)


def _round_up(x, m):
    return ((x + m - 1) // m) * m


def _choose_batch_tile(batch):
    """Batch tile: large enough to amortize per-step + MXU fill/drain overhead,
    small enough to give >=2 grid steps (v7x megacore) when the batch allows.
    Always a multiple of 8 sublanes."""
    b8 = _round_up(max(batch, 1), 8)
    if b8 <= 8:
        return 8
    return min(MAX_TB, _round_up((b8 + 1) // 2, 8))


def _vmem_limit_bytes(tb):
    """Derive the scoped-VMEM limit from the actual footprint (with margin)."""
    p_in = (INPUT_DIM,) + P_HIDDEN
    p_out = P_HIDDEN + (P_OUT,)
    w_bytes = sum(ki * ko for ki, ko in zip(p_in, p_out)) * 2        # bf16 weights
    b_bytes = sum(p_out) * 4                                         # f32 biases
    resident = 2 * (w_bytes + b_bytes)                               # default double-buffer
    x_tile = 2 * tb * INPUT_DIM * 2                                  # bf16 in, double-buffered
    o_tile = 2 * tb * P_OUT * 4                                      # f32 out, double-buffered
    interm = 4 * tb * max(P_HIDDEN) * 4                              # accumulator / bf16-copy headroom
    est = resident + x_tile + o_tile + interm
    return min(max(int(est * 1.5), 16 * 1024 * 1024), 48 * 1024 * 1024)


def _mlp_kernel(x_ref,
                w1_ref, w2_ref, w3_ref, w4_ref, w5_ref, w6_ref,
                b1_ref, b2_ref, b3_ref, b4_ref, b5_ref, b6_ref,
                out_ref):
    # x_ref: (TB, 784) bf16. Weights bf16, biases f32 (1, N).
    # MXU matmuls with f32 accumulation; bias-add + ReLU on the VPU in f32;
    # re-cast to bf16 only as the next matmul input.
    h = x_ref[...]
    for w_ref, b_ref in ((w1_ref, b1_ref), (w2_ref, b2_ref), (w3_ref, b3_ref),
                         (w4_ref, b4_ref), (w5_ref, b5_ref)):
        acc = jnp.dot(h, w_ref[...], preferred_element_type=jnp.float32)
        acc = acc + b_ref[...]
        h = jnp.maximum(acc, 0.0).astype(jnp.bfloat16)
    out = jnp.dot(h, w6_ref[...], preferred_element_type=jnp.float32) + b6_ref[...]
    out_ref[...] = out.astype(out_ref.dtype)


def init_params(key):
    """Deterministic ~N(0,1) params matching the torch.randn shapes in __init__."""
    ks = jax.random.split(key, 12)
    dims = [(INPUT_DIM, HIDDEN[0]), (HIDDEN[0], HIDDEN[1]), (HIDDEN[1], HIDDEN[2]),
            (HIDDEN[2], HIDDEN[3]), (HIDDEN[3], HIDDEN[4]), (HIDDEN[4], OUTPUT_DIM)]
    ws = [jax.random.normal(ks[i], d, dtype=jnp.float32) for i, d in enumerate(dims)]
    bdims = list(HIDDEN) + [OUTPUT_DIM]
    bs = [jax.random.normal(ks[6 + i], (d,), dtype=jnp.float32) for i, d in enumerate(bdims)]
    return (*ws, *bs)


def prepare_params(params):
    """Zero-pad weights/biases to lane-friendly widths (no K padding of the 784
    input dim); weights cast to bf16, biases stay f32 as (1, N) rows."""
    ws_raw = params[:6]
    bs_raw = params[6:]
    in_dims = (INPUT_DIM,) + HIDDEN
    out_dims = HIDDEN + (OUTPUT_DIM,)
    p_in_dims = (INPUT_DIM,) + P_HIDDEN
    p_out_dims = P_HIDDEN + (P_OUT,)

    ws = []
    for w, ki, ko, pki, pko in zip(ws_raw, in_dims, out_dims, p_in_dims, p_out_dims):
        wp = jnp.zeros((pki, pko), jnp.float32).at[:ki, :ko].set(w)
        ws.append(wp.astype(jnp.bfloat16))
    bs = []
    for b, ko, pko in zip(bs_raw, out_dims, p_out_dims):
        bs.append(jnp.zeros((1, pko), jnp.float32).at[0, :ko].set(b))
    return tuple(ws) + tuple(bs)


def classification_ann_forward(x, padded_params, batch_tile=None):
    """x: (B, 1, 28, 28) NCHW or (B, 784). Returns f32 logits (B, 10)."""
    B = x.shape[0]
    x2d = x.reshape(B, -1)
    assert x2d.shape[1] == INPUT_DIM

    tb = batch_tile if batch_tile is not None else _choose_batch_tile(B)
    b_pad = _round_up(B, tb)
    # Pad only the batch dim (features stay at 784) and cast once to bf16
    # (halves the kernel's input DMA bytes; no materialized K-pad pass).
    xp = jnp.zeros((b_pad, INPUT_DIM), jnp.bfloat16).at[:B, :].set(
        x2d.astype(jnp.bfloat16))

    ws = padded_params[:6]
    bs = padded_params[6:]

    const_map = lambda i: (0, 0)            # weights/biases resident across grid steps
    x_spec = pl.BlockSpec((tb, INPUT_DIM), lambda i: (i, 0))
    out_spec = pl.BlockSpec((tb, P_OUT), lambda i: (i, 0))
    # NOTE: single-buffering the grid-invariant operands (pl.Buffered(1)) would
    # shave ~0.8 MiB of VMEM; left at the default for portability headroom.
    w_specs = [pl.BlockSpec(w.shape, const_map) for w in ws]
    b_specs = [pl.BlockSpec(b.shape, const_map) for b in bs]

    out_padded = pl.pallas_call(
        _mlp_kernel,
        out_shape=jax.ShapeDtypeStruct((b_pad, P_OUT), jnp.float32),
        grid=(b_pad // tb,),
        in_specs=[x_spec] + w_specs + b_specs,
        out_specs=out_spec,
        compiler_params=pltpu.CompilerParams(
            dimension_semantics=("parallel",),
            vmem_limit_bytes=_vmem_limit_bytes(tb)),
    )(xp, *ws, *bs)

    return out_padded[:B, :OUTPUT_DIM]


def _reference_forward(x, params):
    # Pure-JAX f32 reference mirroring the PyTorch module.
    (w1, w2, w3, w4, w5, w6, b1, b2, b3, b4, b5, b6) = params
    h = x.reshape(x.shape[0], -1).astype(jnp.float32)
    for w, b in ((w1, b1), (w2, b2), (w3, b3), (w4, b4), (w5, b5)):
        h = jnp.maximum(h @ w + b, 0.0)
    return h @ w6 + b6


if __name__ == "__main__":
    key = jax.random.PRNGKey(0)
    pkey, xkey1, xkey2 = jax.random.split(key, 3)
    params = init_params(pkey)
    padded_params = prepare_params(params)

    # Small NCHW MNIST-like batch: (batch=2, channels=1, 28, 28) -> single grid step.
    x_small = jax.random.normal(xkey1, (2, 1, 28, 28), dtype=jnp.float32)
    out_small = jax.block_until_ready(classification_ann_forward(x_small, padded_params))
    ref_small = _reference_forward(x_small, params)
    assert out_small.shape == (2, OUTPUT_DIM)
    rel_err = float(jnp.max(jnp.abs(out_small - ref_small)) /
                    (jnp.max(jnp.abs(ref_small)) + 1e-6))
    assert rel_err < 5e-2, f"small-batch mismatch vs reference: rel_err={rel_err}"

    # Slightly larger batch to exercise the multi-step ("parallel") grid path.
    x_big = jax.random.normal(xkey2, (64, 1, 28, 28), dtype=jnp.float32)
    out_big = jax.block_until_ready(classification_ann_forward(x_big, padded_params))
    ref_big = _reference_forward(x_big, params)
    assert out_big.shape == (64, OUTPUT_DIM)
    rel_err_b = float(jnp.max(jnp.abs(out_big - ref_big)) /
                      (jnp.max(jnp.abs(ref_big)) + 1e-6))
    assert rel_err_b < 5e-2, f"multi-tile mismatch vs reference: rel_err={rel_err_b}"

    print("KERNEL_OK")
</pallas_src>

<mosaic_0001>
module attributes {stable_mosaic.version = 11 : i64} {
  func.func @_mlp_kernel(%arg0: i32, %arg1: memref<8x784xbf16, #tpu.memory_space<vmem>>, %arg2: memref<784x256xbf16, #tpu.memory_space<vmem>>, %arg3: memref<256x256xbf16, #tpu.memory_space<vmem>>, %arg4: memref<256x256xbf16, #tpu.memory_space<vmem>>, %arg5: memref<256x128xbf16, #tpu.memory_space<vmem>>, %arg6: memref<128x128xbf16, #tpu.memory_space<vmem>>, %arg7: memref<128x128xbf16, #tpu.memory_space<vmem>>, %arg8: memref<1x256xf32, #tpu.memory_space<vmem>>, %arg9: memref<1x256xf32, #tpu.memory_space<vmem>>, %arg10: memref<1x256xf32, #tpu.memory_space<vmem>>, %arg11: memref<1x128xf32, #tpu.memory_space<vmem>>, %arg12: memref<1x128xf32, #tpu.memory_space<vmem>>, %arg13: memref<1x128xf32, #tpu.memory_space<vmem>>, %arg14: memref<8x128xf32, #tpu.memory_space<vmem>>) attributes {dimension_semantics = [#tpu.dimension_semantics<parallel>], iteration_bounds = array<i64: 1>, scalar_prefetch = 0 : i64, scratch_operands = 0 : i64, tpu.core_type = #tpu.core_type<tc>, window_params = [{transform_indices = @transform_0, window_bounds = array<i64: 8, 784>}, {pipeline_mode = #tpu.pipeline_mode<synchronous>, transform_indices = @transform_1, window_bounds = array<i64: 784, 256>}, {pipeline_mode = #tpu.pipeline_mode<synchronous>, transform_indices = @transform_2, window_bounds = array<i64: 256, 256>}, {pipeline_mode = #tpu.pipeline_mode<synchronous>, transform_indices = @transform_3, window_bounds = array<i64: 256, 256>}, {pipeline_mode = #tpu.pipeline_mode<synchronous>, transform_indices = @transform_4, window_bounds = array<i64: 256, 128>}, {pipeline_mode = #tpu.pipeline_mode<synchronous>, transform_indices = @transform_5, window_bounds = array<i64: 128, 128>}, {pipeline_mode = #tpu.pipeline_mode<synchronous>, transform_indices = @transform_6, window_bounds = array<i64: 128, 128>}, {pipeline_mode = #tpu.pipeline_mode<synchronous>, transform_indices = @transform_7, window_bounds = array<i64: 1, 256>}, {pipeline_mode = #tpu.pipeline_mode<synchronous>, transform_indices = @transform_8, window_bounds = array<i64: 1, 256>}, {pipeline_mode = #tpu.pipeline_mode<synchronous>, transform_indices = @transform_9, window_bounds = array<i64: 1, 256>}, {pipeline_mode = #tpu.pipeline_mode<synchronous>, transform_indices = @transform_10, window_bounds = array<i64: 1, 128>}, {pipeline_mode = #tpu.pipeline_mode<synchronous>, transform_indices = @transform_11, window_bounds = array<i64: 1, 128>}, {pipeline_mode = #tpu.pipeline_mode<synchronous>, transform_indices = @transform_12, window_bounds = array<i64: 1, 128>}, {transform_indices = @transform_13, window_bounds = array<i64: 8, 128>}]} {
    %c0 = arith.constant 0 : index
    %c0_0 = arith.constant 0 : index
    %0 = vector.load %arg1[%c0, %c0_0] : memref<8x784xbf16, #tpu.memory_space<vmem>>, vector<8x784xbf16>
    %c0_1 = arith.constant 0 : index
    %c0_2 = arith.constant 0 : index
    %1 = vector.load %arg2[%c0_1, %c0_2] : memref<784x256xbf16, #tpu.memory_space<vmem>>, vector<784x256xbf16>
    %cst = arith.constant dense<0.000000e+00> : vector<8x256xf32>
    %2 = tpu.matmul %0, %1, %cst {dimension_numbers = #tpu.dot_dimension_numbers<[1], [0], [0], [1], [0, 0, 1, 1], [], []>} : vector<8x784xbf16>, vector<784x256xbf16>, vector<8x256xf32> -> vector<8x256xf32>
    %c0_3 = arith.constant 0 : index
    %c0_4 = arith.constant 0 : index
    %3 = vector.load %arg8[%c0_3, %c0_4] : memref<1x256xf32, #tpu.memory_space<vmem>>, vector<1x256xf32>
    %4 = vector.broadcast %3 : vector<1x256xf32> to vector<8x256xf32>
    %5 = arith.addf %2, %4 : vector<8x256xf32>
    %cst_5 = arith.constant 0.000000e+00 : f32
    %6 = vector.broadcast %cst_5 : f32 to vector<8x256xf32>
    %7 = arith.maximumf %5, %6 : vector<8x256xf32>
    %8 = arith.truncf %7 : vector<8x256xf32> to vector<8x256xbf16>
    %c0_6 = arith.constant 0 : index
    %c0_7 = arith.constant 0 : index
    %9 = vector.load %arg3[%c0_6, %c0_7] : memref<256x256xbf16, #tpu.memory_space<vmem>>, vector<256x256xbf16>
    %cst_8 = arith.constant dense<0.000000e+00> : vector<8x256xf32>
    %10 = tpu.matmul %8, %9, %cst_8 {dimension_numbers = #tpu.dot_dimension_numbers<[1], [0], [0], [1], [0, 0, 1, 1], [], []>} : vector<8x256xbf16>, vector<256x256xbf16>, vector<8x256xf32> -> vector<8x256xf32>
    %c0_9 = arith.constant 0 : index
    %c0_10 = arith.constant 0 : index
    %11 = vector.load %arg9[%c0_9, %c0_10] : memref<1x256xf32, #tpu.memory_space<vmem>>, vector<1x256xf32>
    %12 = vector.broadcast %11 : vector<1x256xf32> to vector<8x256xf32>
    %13 = arith.addf %10, %12 : vector<8x256xf32>
    %cst_11 = arith.constant 0.000000e+00 : f32
    %14 = vector.broadcast %cst_11 : f32 to vector<8x256xf32>
    %15 = arith.maximumf %13, %14 : vector<8x256xf32>
    %16 = arith.truncf %15 : vector<8x256xf32> to vector<8x256xbf16>
    %c0_12 = arith.constant 0 : index
    %c0_13 = arith.constant 0 : index
    %17 = vector.load %arg4[%c0_12, %c0_13] : memref<256x256xbf16, #tpu.memory_space<vmem>>, vector<256x256xbf16>
    %cst_14 = arith.constant dense<0.000000e+00> : vector<8x256xf32>
    %18 = tpu.matmul %16, %17, %cst_14 {dimension_numbers = #tpu.dot_dimension_numbers<[1], [0], [0], [1], [0, 0, 1, 1], [], []>} : vector<8x256xbf16>, vector<256x256xbf16>, vector<8x256xf32> -> vector<8x256xf32>
    %c0_15 = arith.constant 0 : index
    %c0_16 = arith.constant 0 : index
    %19 = vector.load %arg10[%c0_15, %c0_16] : memref<1x256xf32, #tpu.memory_space<vmem>>, vector<1x256xf32>
    %20 = vector.broadcast %19 : vector<1x256xf32> to vector<8x256xf32>
    %21 = arith.addf %18, %20 : vector<8x256xf32>
    %cst_17 = arith.constant 0.000000e+00 : f32
    %22 = vector.broadcast %cst_17 : f32 to vector<8x256xf32>
    %23 = arith.maximumf %21, %22 : vector<8x256xf32>
    %24 = arith.truncf %23 : vector<8x256xf32> to vector<8x256xbf16>
    %c0_18 = arith.constant 0 : index
    %c0_19 = arith.constant 0 : index
    %25 = vector.load %arg5[%c0_18, %c0_19] : memref<256x128xbf16, #tpu.memory_space<vmem>>, vector<256x128xbf16>
    %cst_20 = arith.constant dense<0.000000e+00> : vector<8x128xf32>
    %26 = tpu.matmul %24, %25, %cst_20 {dimension_numbers = #tpu.dot_dimension_numbers<[1], [0], [0], [1], [0, 0, 1, 1], [], []>} : vector<8x256xbf16>, vector<256x128xbf16>, vector<8x128xf32> -> vector<8x128xf32>
    %c0_21 = arith.constant 0 : index
    %c0_22 = arith.constant 0 : index
    %27 = vector.load %arg11[%c0_21, %c0_22] : memref<1x128xf32, #tpu.memory_space<vmem>>, vector<1x128xf32>
    %28 = vector.broadcast %27 : vector<1x128xf32> to vector<8x128xf32>
    %29 = arith.addf %26, %28 : vector<8x128xf32>
    %cst_23 = arith.constant 0.000000e+00 : f32
    %30 = vector.broadcast %cst_23 : f32 to vector<8x128xf32>
    %31 = arith.maximumf %29, %30 : vector<8x128xf32>
    %32 = arith.truncf %31 : vector<8x128xf32> to vector<8x128xbf16>
    %c0_24 = arith.constant 0 : index
    %c0_25 = arith.constant 0 : index
    %33 = vector.load %arg6[%c0_24, %c0_25] : memref<128x128xbf16, #tpu.memory_space<vmem>>, vector<128x128xbf16>
    %cst_26 = arith.constant dense<0.000000e+00> : vector<8x128xf32>
    %34 = tpu.matmul %32, %33, %cst_26 {dimension_numbers = #tpu.dot_dimension_numbers<[1], [0], [0], [1], [0, 0, 1, 1], [], []>} : vector<8x128xbf16>, vector<128x128xbf16>, vector<8x128xf32> -> vector<8x128xf32>
    %c0_27 = arith.constant 0 : index
    %c0_28 = arith.constant 0 : index
    %35 = vector.load %arg12[%c0_27, %c0_28] : memref<1x128xf32, #tpu.memory_space<vmem>>, vector<1x128xf32>
    %36 = vector.broadcast %35 : vector<1x128xf32> to vector<8x128xf32>
    %37 = arith.addf %34, %36 : vector<8x128xf32>
    %cst_29 = arith.constant 0.000000e+00 : f32
    %38 = vector.broadcast %cst_29 : f32 to vector<8x128xf32>
    %39 = arith.maximumf %37, %38 : vector<8x128xf32>
    %40 = arith.truncf %39 : vector<8x128xf32> to vector<8x128xbf16>
    %c0_30 = arith.constant 0 : index
    %c0_31 = arith.constant 0 : index
    %41 = vector.load %arg7[%c0_30, %c0_31] : memref<128x128xbf16, #tpu.memory_space<vmem>>, vector<128x128xbf16>
    %cst_32 = arith.constant dense<0.000000e+00> : vector<8x128xf32>
    %42 = tpu.matmul %40, %41, %cst_32 {dimension_numbers = #tpu.dot_dimension_numbers<[1], [0], [0], [1], [0, 0, 1, 1], [], []>} : vector<8x128xbf16>, vector<128x128xbf16>, vector<8x128xf32> -> vector<8x128xf32>
    %c0_33 = arith.constant 0 : index
    %c0_34 = arith.constant 0 : index
    %43 = vector.load %arg13[%c0_33, %c0_34] : memref<1x128xf32, #tpu.memory_space<vmem>>, vector<1x128xf32>
    %44 = vector.broadcast %43 : vector<1x128xf32> to vector<8x128xf32>
    %45 = arith.addf %42, %44 : vector<8x128xf32>
    %c0_35 = arith.constant 0 : index
    %c0_36 = arith.constant 0 : index
    %46 = vector.load %arg14[%c0_35, %c0_36] : memref<8x128xf32, #tpu.memory_space<vmem>>, vector<8x128xf32>
    tpu.vector_store %arg14[%c0_35, %c0_36], %45 {strides = array<i32>} : memref<8x128xf32, #tpu.memory_space<vmem>>, vector<8x128xf32>,
    return
  }
  func.func @transform_0(%arg0: i32) -> (i32, i32) {
    %c0_i32 = arith.constant 0 : i32
    %c0_i32_0 = arith.constant 0 : i32
    return %arg0, %c0_i32 : i32, i32
  }
  func.func @transform_1(%arg0: i32) -> (i32, i32) {
    %c0_i32 = arith.constant 0 : i32
    %c0_i32_0 = arith.constant 0 : i32
    %c0_i32_1 = arith.constant 0 : i32
    return %c0_i32, %c0_i32_0 : i32, i32
  }
  func.func @transform_2(%arg0: i32) -> (i32, i32) {
    %c0_i32 = arith.constant 0 : i32
    %c0_i32_0 = arith.constant 0 : i32
    %c0_i32_1 = arith.constant 0 : i32
    return %c0_i32, %c0_i32_0 : i32, i32
  }
  func.func @transform_3(%arg0: i32) -> (i32, i32) {
    %c0_i32 = arith.constant 0 : i32
    %c0_i32_0 = arith.constant 0 : i32
    %c0_i32_1 = arith.constant 0 : i32
    return %c0_i32, %c0_i32_0 : i32, i32
  }
  func.func @transform_4(%arg0: i32) -> (i32, i32) {
    %c0_i32 = arith.constant 0 : i32
    %c0_i32_0 = arith.constant 0 : i32
    %c0_i32_1 = arith.constant 0 : i32
    return %c0_i32, %c0_i32_0 : i32, i32
  }
  func.func @transform_5(%arg0: i32) -> (i32, i32) {
    %c0_i32 = arith.constant 0 : i32
    %c0_i32_0 = arith.constant 0 : i32
    %c0_i32_1 = arith.constant 0 : i32
    return %c0_i32, %c0_i32_0 : i32, i32
  }
  func.func @transform_6(%arg0: i32) -> (i32, i32) {
    %c0_i32 = arith.constant 0 : i32
    %c0_i32_0 = arith.constant 0 : i32
    %c0_i32_1 = arith.constant 0 : i32
    return %c0_i32, %c0_i32_0 : i32, i32
  }
  func.func @transform_7(%arg0: i32) -> (i32, i32) {
    %c0_i32 = arith.constant 0 : i32
    %c0_i32_0 = arith.constant 0 : i32
    %c0_i32_1 = arith.constant 0 : i32
    return %c0_i32, %c0_i32_0 : i32, i32
  }
  func.func @transform_8(%arg0: i32) -> (i32, i32) {
    %c0_i32 = arith.constant 0 : i32
    %c0_i32_0 = arith.constant 0 : i32
    %c0_i32_1 = arith.constant 0 : i32
    return %c0_i32, %c0_i32_0 : i32, i32
  }
  func.func @transform_9(%arg0: i32) -> (i32, i32) {
    %c0_i32 = arith.constant 0 : i32
    %c0_i32_0 = arith.constant 0 : i32
    %c0_i32_1 = arith.constant 0 : i32
    return %c0_i32, %c0_i32_0 : i32, i32
  }
  func.func @transform_10(%arg0: i32) -> (i32, i32) {
    %c0_i32 = arith.constant 0 : i32
    %c0_i32_0 = arith.constant 0 : i32
    %c0_i32_1 = arith.constant 0 : i32
    return %c0_i32, %c0_i32_0 : i32, i32
  }
  func.func @transform_11(%arg0: i32) -> (i32, i32) {
    %c0_i32 = arith.constant 0 : i32
    %c0_i32_0 = arith.constant 0 : i32
    %c0_i32_1 = arith.constant 0 : i32
    return %c0_i32, %c0_i32_0 : i32, i32
  }
  func.func @transform_12(%arg0: i32) -> (i32, i32) {
    %c0_i32 = arith.constant 0 : i32
    %c0_i32_0 = arith.constant 0 : i32
    %c0_i32_1 = arith.constant 0 : i32
    return %c0_i32, %c0_i32_0 : i32, i32
  }
  func.func @transform_13(%arg0: i32) -> (i32, i32) {
    %c0_i32 = arith.constant 0 : i32
    %c0_i32_0 = arith.constant 0 : i32
    return %arg0, %c0_i32 : i32, i32
  }
}

</mosaic_0001>

<llo_original>
// kernel: tpu_custom_call.1
$region0: #{tpu_custom_call.1}
  #allocation0 [shape = 'u32[]', space=smem, size = 0x4, offset = 0x4, fixed_abs, tag = 'smem constant byte address 0x4 - core index']
  #allocation1 [shape = 'u32[144,128]{1,0:T(1,128)}', space=vmem, size = 0x12000, scoped, tag = 'internal scratch']
  %s0 = inlined_call_operand.hbm [shape: bf16[8,784], index: 0, kind: input, shape index: {}]
  %s1 = inlined_call_operand.hbm [shape: bf16[784,256], index: 1, kind: input, shape index: {}]
  %s2 = inlined_call_operand.hbm [shape: bf16[256,256], index: 2, kind: input, shape index: {}]
  %s3 = inlined_call_operand.hbm [shape: bf16[256,256], index: 3, kind: input, shape index: {}]
  %s4 = inlined_call_operand.hbm [shape: bf16[256,128], index: 4, kind: input, shape index: {}]
  %s5 = inlined_call_operand.hbm [shape: bf16[128,128], index: 5, kind: input, shape index: {}]
  %s6 = inlined_call_operand.hbm [shape: bf16[128,128], index: 6, kind: input, shape index: {}]
  %s7 = inlined_call_operand.vmem [shape: f32[1,256], index: 7, kind: input, shape index: {}]
  %s8 = inlined_call_operand.vmem [shape: f32[1,256], index: 8, kind: input, shape index: {}]
  %s9 = inlined_call_operand.vmem [shape: f32[1,256], index: 9, kind: input, shape index: {}]
  %s10 = inlined_call_operand.vmem [shape: f32[1,128], index: 10, kind: input, shape index: {}]
  %s11 = inlined_call_operand.vmem [shape: f32[1,128], index: 11, kind: input, shape index: {}]
  %s12 = inlined_call_operand.vmem [shape: f32[1,128], index: 12, kind: input, shape index: {}]
  %s13 = inlined_call_operand.hbm [shape: f32[8,128], index: 13, kind: output, shape index: {}]
  %s14 = sld [smem:[#allocation0]]
  $region90: #{tpu_custom_call.1} parent=0
    _
  %s16 = ssub.s32 1, %s14
  %s17 = scalar_select 0, %s16, %s14
  $region1: #{tpu_custom_call.1} parent=0
    #allocation2 [shape = 'u8[14336]{0}', space=vmem, size = 0x3800, scoped, tag = 'input window, operand 0, single buffered']
    #allocation3 [shape = 's32[1]{0}', space=sflag, size = 0x4, scoped, tag = 'scoped memory for tpu_custom_call.1']
    #allocation4 [shape = 's32[1]{0}', space=sflag, size = 0x4, scoped, tag = 'scoped memory for tpu_custom_call.1']
    #allocation5 [shape = 'u8[401408]{0}', space=vmem, size = 0x62000, scoped, tag = 'input window, operand 1, single buffered']
    #allocation6 [shape = 's32[1]{0}', space=sflag, size = 0x4, scoped, tag = 'scoped memory for tpu_custom_call.1']
    #allocation7 [shape = 'u8[131072]{0}', space=vmem, size = 0x20000, scoped, tag = 'input window, operand 2, single buffered']
    #allocation8 [shape = 'u8[131072]{0}', space=vmem, size = 0x20000, scoped, tag = 'input window, operand 3, single buffered']
    #allocation9 [shape = 's32[1]{0}', space=sflag, size = 0x4, scoped, tag = 'scoped memory for tpu_custom_call.1']
    #allocation10 [shape = 'u8[65536]{0}', space=vmem, size = 0x10000, scoped, tag = 'input window, operand 4, single buffered']
    #allocation11 [shape = 'u8[32768]{0}', space=vmem, size = 0x8000, scoped, tag = 'input window, operand 5, single buffered']
    #allocation12 [shape = 's32[1]{0}', space=sflag, size = 0x4, scoped, tag = 'scoped memory for tpu_custom_call.1']
    #allocation13 [shape = 'u8[32768]{0}', space=vmem, size = 0x8000, scoped, tag = 'input window, operand 6, single buffered']
    #allocation14 [shape = 'u8[4096]{0}', space=vmem, size = 0x1000, scoped, tag = 'output window, operand 0, single buffered']
    %18 = vsyncpa [#allocation3], 0
    %19 = vsyncpa [#allocation6], 0
    %20 = vsyncpa [#allocation9], 0
    %21 = vsyncpa [#allocation12], 0
    %22 = vsyncpa [#allocation4], 0
    // Predicated region
    $region2: #{tpu_custom_call.1} parent=1 // pred_check
      _
    $region3: #{tpu_custom_call.1} parent=1 // pred_check_branch
      %24 = sbr.rel (0) target = $region5
    $region4: #{tpu_custom_call.1} parent=1 // pred_region
      %s26 = ssub.s32 448, 448
      %27 = vsyncadd [#allocation3], %s26
      %s29 = sshll.u32 [#allocation2], 4
      %s30 = int_to_ptr.vmem [resolvable:$true] %s29
      %32 = dma.hbm_to_vmem [thread:$0]  %s0, 448, %s30, [#allocation3]
    $region5: #{tpu_custom_call.1} parent=1 // pred_fallthru
      _
    // Predicated region
    $region6: #{tpu_custom_call.1} parent=1 // pred_check
      _
    $region7: #{tpu_custom_call.1} parent=1 // pred_check_branch
      %34 = sbr.rel (0) target = $region9
    $region8: #{tpu_custom_call.1} parent=1 // pred_region
      %s36 = ssub.s32 12544, 12544
      %37 = vsyncadd [#allocation6], %s36
      %s38 = sshll.u32 [#allocation5], 4
      %s39 = int_to_ptr.vmem [resolvable:$true] %s38
      %44 = dma.hbm_to_vmem [thread:$0]  %s1, 12544, %s39, [#allocation6], 128, 128, 8
    $region9: #{tpu_custom_call.1} parent=1 // pred_fallthru
      _
    // Predicated region
    $region10: #{tpu_custom_call.1} parent=1 // pred_check
      _
    $region11: #{tpu_custom_call.1} parent=1 // pred_check_branch
      %46 = sbr.rel (0) target = $region13
    $region12: #{tpu_custom_call.1} parent=1 // pred_region
      %s48 = ssub.s32 4096, 4096
      %49 = vsyncadd [#allocation6], %s48
      %s50 = sshll.u32 [#allocation7], 4
      %s51 = int_to_ptr.vmem [resolvable:$true] %s50
      %56 = dma.hbm_to_vmem [thread:$0]  %s2, 4096, %s51, [#allocation6], 128, 128, 8
    $region13: #{tpu_custom_call.1} parent=1 // pred_fallthru
      _
    // Predicated region
    $region14: #{tpu_custom_call.1} parent=1 // pred_check
      _
    $region15: #{tpu_custom_call.1} parent=1 // pred_check_branch
      %58 = sbr.rel (0) target = $region17
    $region16: #{tpu_custom_call.1} parent=1 // pred_region
      %s60 = ssub.s32 4096, 4096
      %61 = vsyncadd [#allocation9], %s60
      %s62 = sshll.u32 [#allocation8], 4
      %s63 = int_to_ptr.vmem [resolvable:$true] %s62
      %68 = dma.hbm_to_vmem [thread:$0]  %s3, 4096, %s63, [#allocation9], 128, 128, 8
    $region17: #{tpu_custom_call.1} parent=1 // pred_fallthru
      _
    // Predicated region
    $region18: #{tpu_custom_call.1} parent=1 // pred_check
      _
    $region19: #{tpu_custom_call.1} parent=1 // pred_check_branch
      %70 = sbr.rel (0) target = $region21
    $region20: #{tpu_custom_call.1} parent=1 // pred_region
      %s72 = ssub.s32 2048, 2048
      %73 = vsyncadd [#allocation9], %s72
      %s74 = sshll.u32 [#allocation10], 4
      %s75 = int_to_ptr.vmem [resolvable:$true] %s74
      %80 = dma.hbm_to_vmem [thread:$0]  %s4, 2048, %s75, [#allocation9], 64, 64, 4
    $region21: #{tpu_custom_call.1} parent=1 // pred_fallthru
      _
    // Predicated region
    $region22: #{tpu_custom_call.1} parent=1 // pred_check
      _
    $region23: #{tpu_custom_call.1} parent=1 // pred_check_branch
      %82 = sbr.rel (0) target = $region25
    $region24: #{tpu_custom_call.1} parent=1 // pred_region
      %s84 = ssub.s32 1024, 1024
      %85 = vsyncadd [#allocation12], %s84
      %s86 = sshll.u32 [#allocation11], 4
      %s87 = int_to_ptr.vmem [resolvable:$true] %s86
      %92 = dma.hbm_to_vmem [thread:$0]  %s5, 1024, %s87, [#allocation12], 64, 64, 4
    $region25: #{tpu_custom_call.1} parent=1 // pred_fallthru
      _
    // Predicated region
    $region26: #{tpu_custom_call.1} parent=1 // pred_check
      _
    $region27: #{tpu_custom_call.1} parent=1 // pred_check_branch
      %94 = sbr.rel (0) target = $region29
    $region28: #{tpu_custom_call.1} parent=1 // pred_region
      %s96 = ssub.s32 1024, 1024
      %97 = vsyncadd [#allocation12], %s96
      %s98 = sshll.u32 [#allocation13], 4
      %s99 = int_to_ptr.vmem [resolvable:$true] %s98
      %104 = dma.hbm_to_vmem [thread:$0]  %s6, 1024, %s99, [#allocation12], 64, 64, 4
    $region29: #{tpu_custom_call.1} parent=1 // pred_fallthru
      _
    // Predicated region
    $region30: #{tpu_custom_call.1} parent=1 // pred_check
      _
    $region31: #{tpu_custom_call.1} parent=1 // pred_check_branch
      %106 = sbr.rel (0) target = $region33
    $region32: #{tpu_custom_call.1} parent=1 // pred_region
      _
    $region33: #{tpu_custom_call.1} parent=1 // pred_fallthru
      _
    // Predicated region
    $region34: #{tpu_custom_call.1} parent=1 // pred_check
      _
    $region35: #{tpu_custom_call.1} parent=1 // pred_check_branch
      %108 = sbr.rel (0) target = $region37
    $region36: #{tpu_custom_call.1} parent=1 // pred_region
      _
    $region37: #{tpu_custom_call.1} parent=1 // pred_fallthru
      _
    // Predicated region
    $region38: #{tpu_custom_call.1} parent=1 // pred_check
      _
    $region39: #{tpu_custom_call.1} parent=1 // pred_check_branch
      %110 = sbr.rel (0) target = $region41
    $region40: #{tpu_custom_call.1} parent=1 // pred_region
      _
    $region41: #{tpu_custom_call.1} parent=1 // pred_fallthru
      _
    // Predicated region
    $region42: #{tpu_custom_call.1} parent=1 // pred_check
      _
    $region43: #{tpu_custom_call.1} parent=1 // pred_check_branch
      %112 = sbr.rel (0) target = $region45
    $region44: #{tpu_custom_call.1} parent=1 // pred_region
      _
    $region45: #{tpu_custom_call.1} parent=1 // pred_fallthru
      _
    // Predicated region
    $region46: #{tpu_custom_call.1} parent=1 // pred_check
      _
    $region47: #{tpu_custom_call.1} parent=1 // pred_check_branch
      %114 = sbr.rel (0) target = $region49
    $region48: #{tpu_custom_call.1} parent=1 // pred_region
      _
    $region49: #{tpu_custom_call.1} parent=1 // pred_fallthru
      _
    // Predicated region
    $region50: #{tpu_custom_call.1} parent=1 // pred_check
      _
    $region51: #{tpu_custom_call.1} parent=1 // pred_check_branch
      %116 = sbr.rel (0) target = $region53
    $region52: #{tpu_custom_call.1} parent=1 // pred_region
      _
    $region53: #{tpu_custom_call.1} parent=1 // pred_fallthru
      _
    // Predicated region
    $region54: #{tpu_custom_call.1} parent=1 // pred_check
      _
    $region55: #{tpu_custom_call.1} parent=1 // pred_check_branch
      %118 = sbr.rel (0) target = $region57
    $region56: #{tpu_custom_call.1} parent=1 // pred_region
      %119 = dma.done [#allocation3], 448
    $region57: #{tpu_custom_call.1} parent=1 // pred_fallthru
      _
    // Predicated region
    $region58: #{tpu_custom_call.1} parent=1 // pred_check
      _
    $region59: #{tpu_custom_call.1} parent=1 // pred_check_branch
      %121 = sbr.rel (0) target = $region61
    $region60: #{tpu_custom_call.1} parent=1 // pred_region
      %122 = dma.done [#allocation6], 12544
    $region61: #{tpu_custom_call.1} parent=1 // pred_fallthru
      _
    // Predicated region
    $region62: #{tpu_custom_call.1} parent=1 // pred_check
      _
    $region63: #{tpu_custom_call.1} parent=1 // pred_check_branch
      %124 = sbr.rel (0) target = $region65
    $region64: #{tpu_custom_call.1} parent=1 // pred_region
      %125 = dma.done [#allocation6], 4096
    $region65: #{tpu_custom_call.1} parent=1 // pred_fallthru
      _
    // Predicated region
    $region66: #{tpu_custom_call.1} parent=1 // pred_check
      _
    $region67: #{tpu_custom_call.1} parent=1 // pred_check_branch
      %127 = sbr.rel (0) target = $region69
    $region68: #{tpu_custom_call.1} parent=1 // pred_region
      %128 = dma.done [#allocation9], 4096
    $region69: #{tpu_custom_call.1} parent=1 // pred_fallthru
      _
    // Predicated region
    $region70: #{tpu_custom_call.1} parent=1 // pred_check
      _
    $region71: #{tpu_custom_call.1} parent=1 // pred_check_branch
      %130 = sbr.rel (0) target = $region73
    $region72: #{tpu_custom_call.1} parent=1 // pred_region
      %131 = dma.done [#allocation9], 2048
    $region73: #{tpu_custom_call.1} parent=1 // pred_fallthru
      _
    // Predicated region
    $region74: #{tpu_custom_call.1} parent=1 // pred_check
      _
    $region75: #{tpu_custom_call.1} parent=1 // pred_check_branch
      %133 = sbr.rel (0) target = $region77
    $region76: #{tpu_custom_call.1} parent=1 // pred_region
      %134 = dma.done [#allocation12], 1024
    $region77: #{tpu_custom_call.1} parent=1 // pred_fallthru
      _
    // Predicated region
    $region78: #{tpu_custom_call.1} parent=1 // pred_check
      _
    $region79: #{tpu_custom_call.1} parent=1 // pred_check_branch
      %136 = sbr.rel (0) target = $region81
    $region80: #{tpu_custom_call.1} parent=1 // pred_region
      %137 = dma.done [#allocation12], 1024
    $region81: #{tpu_custom_call.1} parent=1 // pred_fallthru
      _
    %v139 = vld [vmem:[#allocation2] sm:$0xff]
    %v140 = vld [vmem:[#allocation2 + $0x8] sm:$0xff]
    %v141 = vld [vmem:[#allocation2 + $0x10] sm:$0xff]
    %v142 = vld [vmem:[#allocation2 + $0x18] sm:$0xf]
    %v143 = vld [vmem:[#allocation5] sm:$0xff]
    %v144 = vld [vmem:[#allocation5 + $0x8] sm:$0xff]
    %v145 = vld [vmem:[#allocation5 + $0x10] sm:$0xff]
    %v146 = vld [vmem:[#allocation5 + $0x18] sm:$0xff]
    %v147 = vld [vmem:[#allocation5 + $0x20] sm:$0xff]
    %v148 = vld [vmem:[#allocation5 + $0x28] sm:$0xff]
    %v149 = vld [vmem:[#allocation5 + $0x30] sm:$0xff]
    %v150 = vld [vmem:[#allocation5 + $0x38] sm:$0xff]
    %v151 = vld [vmem:[#allocation5 + $0x40] sm:$0xff]
    %v152 = vld [vmem:[#allocation5 + $0x48] sm:$0xff]
    %v153 = vld [vmem:[#allocation5 + $0x50] sm:$0xff]
    %v154 = vld [vmem:[#allocation5 + $0x58] sm:$0xff]
    %v155 = vld [vmem:[#allocation5 + $0x60] sm:$0xff]
    %v156 = vld [vmem:[#allocation5 + $0x68] sm:$0xff]
    %v157 = vld [vmem:[#allocation5 + $0x70] sm:$0xff]
    %v158 = vld [vmem:[#allocation5 + $0x78] sm:$0xff]
    %v159 = vld [vmem:[#allocation5 + $0x80] sm:$0xff]
    %v160 = vld [vmem:[#allocation5 + $0x88] sm:$0xff]
    %v161 = vld [vmem:[#allocation5 + $0x90] sm:$0xff]
    %v162 = vld [vmem:[#allocation5 + $0x98] sm:$0xff]
    %v163 = vld [vmem:[#allocation5 + $0xa0] sm:$0xff]
    %v164 = vld [vmem:[#allocation5 + $0xa8] sm:$0xff]
    %v165 = vld [vmem:[#allocation5 + $0xb0] sm:$0xff]
    %v166 = vld [vmem:[#allocation5 + $0xb8] sm:$0xff]
    %v167 = vld [vmem:[#allocation5 + $0xc0] sm:$0xff]
    %v168 = vld [vmem:[#allocation5 + $0xc8] sm:$0xff]
    %v169 = vld [vmem:[#allocation5 + $0xd0] sm:$0xff]
    %v170 = vld [vmem:[#allocation5 + $0xd8] sm:$0xff]
    %v171 = vld [vmem:[#allocation5 + $0xe0] sm:$0xff]
    %v172 = vld [vmem:[#allocation5 + $0xe8] sm:$0xff]
    %v173 = vld [vmem:[#allocation5 + $0xf0] sm:$0xff]
    %v174 = vld [vmem:[#allocation5 + $0xf8] sm:$0xff]
    %v175 = vld [vmem:[#allocation5 + $0x100] sm:$0xff]
    %v176 = vld [vmem:[#allocation5 + $0x108] sm:$0xff]
    %v177 = vld [vmem:[#allocation5 + $0x110] sm:$0xff]
    %v178 = vld [vmem:[#allocation5 + $0x118] sm:$0xff]
    %v179 = vld [vmem:[#allocation5 + $0x120] sm:$0xff]
    %v180 = vld [vmem:[#allocation5 + $0x128] sm:$0xff]
    %v181 = vld [vmem:[#allocation5 + $0x130] sm:$0xff]
    %v182 = vld [vmem:[#allocation5 + $0x138] sm:$0xff]
    %v183 = vld [vmem:[#allocation5 + $0x140] sm:$0xff]
    %v184 = vld [vmem:[#allocation5 + $0x148] sm:$0xff]
    %v185 = vld [vmem:[#allocation5 + $0x150] sm:$0xff]
    %v186 = vld [vmem:[#allocation5 + $0x158] sm:$0xff]
    %v187 = vld [vmem:[#allocation5 + $0x160] sm:$0xff]
    %v188 = vld [vmem:[#allocation5 + $0x168] sm:$0xff]
    %v189 = vld [vmem:[#allocation5 + $0x170] sm:$0xff]
    %v190 = vld [vmem:[#allocation5 + $0x178] sm:$0xff]
    %v191 = vld [vmem:[#allocation5 + $0x180] sm:$0xff]
    %v192 = vld [vmem:[#allocation5 + $0x188] sm:$0xff]
    %v193 = vld [vmem:[#allocation5 + $0x190] sm:$0xff]
    %v194 = vld [vmem:[#allocation5 + $0x198] sm:$0xff]
    %v195 = vld [vmem:[#allocation5 + $0x1a0] sm:$0xff]
    %v196 = vld [vmem:[#allocation5 + $0x1a8] sm:$0xff]
    %v197 = vld [vmem:[#allocation5 + $0x1b0] sm:$0xff]
    %v198 = vld [vmem:[#allocation5 + $0x1b8] sm:$0xff]
    %v199 = vld [vmem:[#allocation5 + $0x1c0] sm:$0xff]
    %v200 = vld [vmem:[#allocation5 + $0x1c8] sm:$0xff]
    %v201 = vld [vmem:[#allocation5 + $0x1d0] sm:$0xff]
    %v202 = vld [vmem:[#allocation5 + $0x1d8] sm:$0xff]
    %v203 = vld [vmem:[#allocation5 + $0x1e0] sm:$0xff]
    %v204 = vld [vmem:[#allocation5 + $0x1e8] sm:$0xff]
    %v205 = vld [vmem:[#allocation5 + $0x1f0] sm:$0xff]
    %v206 = vld [vmem:[#allocation5 + $0x1f8] sm:$0xff]
    %v207 = vld [vmem:[#allocation5 + $0x200] sm:$0xff]
    %v208 = vld [vmem:[#allocation5 + $0x208] sm:$0xff]
    %v209 = vld [vmem:[#allocation5 + $0x210] sm:$0xff]
    %v210 = vld [vmem:[#allocation5 + $0x218] sm:$0xff]
    %v211 = vld [vmem:[#allocation5 + $0x220] sm:$0xff]
    %v212 = vld [vmem:[#allocation5 + $0x228] sm:$0xff]
    %v213 = vld [vmem:[#allocation5 + $0x230] sm:$0xff]
    %v214 = vld [vmem:[#allocation5 + $0x238] sm:$0xff]
    %v215 = vld [vmem:[#allocation5 + $0x240] sm:$0xff]
    %v216 = vld [vmem:[#allocation5 + $0x248] sm:$0xff]
    %v217 = vld [vmem:[#allocation5 + $0x250] sm:$0xff]
    %v218 = vld [vmem:[#allocation5 + $0x258] sm:$0xff]
    %v219 = vld [vmem:[#allocation5 + $0x260] sm:$0xff]
    %v220 = vld [vmem:[#allocation5 + $0x268] sm:$0xff]
    %v221 = vld [vmem:[#allocation5 + $0x270] sm:$0xff]
    %v222 = vld [vmem:[#allocation5 + $0x278] sm:$0xff]
    %v223 = vld [vmem:[#allocation5 + $0x280] sm:$0xff]
    %v224 = vld [vmem:[#allocation5 + $0x288] sm:$0xff]
    %v225 = vld [vmem:[#allocation5 + $0x290] sm:$0xff]
    %v226 = vld [vmem:[#allocation5 + $0x298] sm:$0xff]
    %v227 = vld [vmem:[#allocation5 + $0x2a0] sm:$0xff]
    %v228 = vld [vmem:[#allocation5 + $0x2a8] sm:$0xff]
    %v229 = vld [vmem:[#allocation5 + $0x2b0] sm:$0xff]
    %v230 = vld [vmem:[#allocation5 + $0x2b8] sm:$0xff]
    %v231 = vld [vmem:[#allocation5 + $0x2c0] sm:$0xff]
    %v232 = vld [vmem:[#allocation5 + $0x2c8] sm:$0xff]
    %v233 = vld [vmem:[#allocation5 + $0x2d0] sm:$0xff]
    %v234 = vld [vmem:[#allocation5 + $0x2d8] sm:$0xff]
    %v235 = vld [vmem:[#allocation5 + $0x2e0] sm:$0xff]
    %v236 = vld [vmem:[#allocation5 + $0x2e8] sm:$0xff]
    %v237 = vld [vmem:[#allocation5 + $0x2f0] sm:$0xff]
    %v238 = vld [vmem:[#allocation5 + $0x2f8] sm:$0xff]
    %v239 = vld [vmem:[#allocation5 + $0x300] sm:$0xff]
    %v240 = vld [vmem:[#allocation5 + $0x308] sm:$0xff]
    %v241 = vld [vmem:[%s7] sm:$0x3]
    %v243 = vlaneseq
    %v244 = vshrl.u32 %v243, 7
    %v245 = vsub.s32 0, %v244
    %v246 = vrot.slane %v241, %v245
    %v247 = vlaneseq
    %v248 = vshrl.u32 %v247, 7
    %v249 = vsub.s32 1, %v248
    %v250 = vrot.slane %v241, %v249
    %v257 = vunpack.c.l.b16 %v139
    %v258 = vunpack.c.h.b16 %v139
    %v259 = vunpack.c.l.b16 %v140
    %v260 = vunpack.c.h.b16 %v140
    %v261 = vunpack.c.l.b16 %v141
    %v262 = vunpack.c.h.b16 %v141
    %v263 = vunpack.c.l.b16 %v142
    %v264 = vpack.c.b16 %v257, %v257
    %v265 = vpack.c.b16 %v258, %v258
    %v266 = vpack.c.b16 %v259, %v259
    %v267 = vpack.c.b16 %v260, %v260
    %v268 = vpack.c.b16 %v261, %v261
    %v269 = vpack.c.b16 %v262, %v262
    %v270 = vpack.c.b16 %v263, %v263
    %v375 = vunpack.c.l.b16 %v143
    %v376 = vunpack.c.h.b16 %v143
    %v377 = vunpack.c.l.b16 %v144
    %v378 = vunpack.c.h.b16 %v144
    %v379 = vunpack.c.l.b16 %v145
    %v380 = vunpack.c.h.b16 %v145
    %v381 = vunpack.c.l.b16 %v146
    %v382 = vunpack.c.h.b16 %v146
    %v383 = vunpack.c.l.b16 %v147
    %v384 = vunpack.c.h.b16 %v147
    %v385 = vunpack.c.l.b16 %v148
    %v386 = vunpack.c.h.b16 %v148
    %v387 = vunpack.c.l.b16 %v149
    %v388 = vunpack.c.h.b16 %v149
    %v389 = vunpack.c.l.b16 %v150
    %v390 = vunpack.c.h.b16 %v150
    %v391 = vunpack.c.l.b16 %v151
    %v392 = vunpack.c.h.b16 %v151
    %v393 = vunpack.c.l.b16 %v152
    %v394 = vunpack.c.h.b16 %v152
    %v395 = vunpack.c.l.b16 %v153
    %v396 = vunpack.c.h.b16 %v153
    %v397 = vunpack.c.l.b16 %v154
    %v398 = vunpack.c.h.b16 %v154
    %v399 = vunpack.c.l.b16 %v155
    %v400 = vunpack.c.h.b16 %v155
    %v401 = vunpack.c.l.b16 %v156
    %v402 = vunpack.c.h.b16 %v156
    %v403 = vunpack.c.l.b16 %v157
    %v404 = vunpack.c.h.b16 %v157
    %v405 = vunpack.c.l.b16 %v158
    %v406 = vunpack.c.h.b16 %v158
    %v407 = vunpack.c.l.b16 %v159
    %v408 = vunpack.c.h.b16 %v159
    %v409 = vunpack.c.l.b16 %v160
    %v410 = vunpack.c.h.b16 %v160
    %v411 = vunpack.c.l.b16 %v161
    %v412 = vunpack.c.h.b16 %v161
    %v413 = vunpack.c.l.b16 %v162
    %v414 = vunpack.c.h.b16 %v162
    %v415 = vunpack.c.l.b16 %v163
    %v416 = vunpack.c.h.b16 %v163
    %v417 = vunpack.c.l.b16 %v164
    %v418 = vunpack.c.h.b16 %v164
    %v419 = vunpack.c.l.b16 %v165
    %v420 = vunpack.c.h.b16 %v165
    %v421 = vunpack.c.l.b16 %v166
    %v422 = vunpack.c.h.b16 %v166
    %v423 = vunpack.c.l.b16 %v167
    %v424 = vunpack.c.h.b16 %v167
    %v425 = vunpack.c.l.b16 %v168
    %v426 = vunpack.c.h.b16 %v168
    %v427 = vunpack.c.l.b16 %v169
    %v428 = vunpack.c.h.b16 %v169
    %v429 = vunpack.c.l.b16 %v170
    %v430 = vunpack.c.h.b16 %v170
    %v431 = vunpack.c.l.b16 %v171
    %v432 = vunpack.c.h.b16 %v171
    %v433 = vunpack.c.l.b16 %v172
    %v434 = vunpack.c.h.b16 %v172
    %v435 = vunpack.c.l.b16 %v173
    %v436 = vunpack.c.h.b16 %v173
    %v437 = vunpack.c.l.b16 %v174
    %v438 = vunpack.c.h.b16 %v174
    %v439 = vunpack.c.l.b16 %v175
    %v440 = vunpack.c.h.b16 %v175
    %v441 = vunpack.c.l.b16 %v176
    %v442 = vunpack.c.h.b16 %v176
    %v443 = vunpack.c.l.b16 %v177
    %v444 = vunpack.c.h.b16 %v177
    %v445 = vunpack.c.l.b16 %v178
    %v446 = vunpack.c.h.b16 %v178
    %v447 = vunpack.c.l.b16 %v179
    %v448 = vunpack.c.h.b16 %v179
    %v449 = vunpack.c.l.b16 %v180
    %v450 = vunpack.c.h.b16 %v180
    %v451 = vunpack.c.l.b16 %v181
    %v452 = vunpack.c.h.b16 %v181
    %v453 = vunpack.c.l.b16 %v182
    %v454 = vunpack.c.h.b16 %v182
    %v455 = vunpack.c.l.b16 %v183
    %v456 = vunpack.c.h.b16 %v183
    %v457 = vunpack.c.l.b16 %v184
    %v458 = vunpack.c.h.b16 %v184
    %v459 = vunpack.c.l.b16 %v185
    %v460 = vunpack.c.h.b16 %v185
    %v461 = vunpack.c.l.b16 %v186
    %v462 = vunpack.c.h.b16 %v186
    %v463 = vunpack.c.l.b16 %v187
    %v464 = vunpack.c.h.b16 %v187
    %v465 = vunpack.c.l.b16 %v188
    %v466 = vunpack.c.h.b16 %v188
    %v467 = vunpack.c.l.b16 %v189
    %v468 = vunpack.c.h.b16 %v189
    %v469 = vunpack.c.l.b16 %v190
    %v470 = vunpack.c.h.b16 %v190
    %v471 = vunpack.c.l.b16 %v191
    %v472 = vunpack.c.h.b16 %v191
    %v473 = vunpack.c.l.b16 %v192
    %v474 = vunpack.c.h.b16 %v192
    %v475 = vunpack.c.l.b16 %v193
    %v476 = vunpack.c.h.b16 %v193
    %v477 = vunpack.c.l.b16 %v194
    %v478 = vunpack.c.h.b16 %v194
    %v479 = vunpack.c.l.b16 %v195
    %v480 = vunpack.c.h.b16 %v195
    %v481 = vunpack.c.l.b16 %v196
    %v482 = vunpack.c.h.b16 %v196
    %v483 = vunpack.c.l.b16 %v197
    %v484 = vunpack.c.h.b16 %v197
    %v485 = vunpack.c.l.b16 %v198
    %v486 = vunpack.c.h.b16 %v198
    %v487 = vunpack.c.l.b16 %v199
    %v488 = vunpack.c.h.b16 %v199
    %v489 = vunpack.c.l.b16 %v200
    %v490 = vunpack.c.h.b16 %v200
    %v491 = vunpack.c.l.b16 %v201
    %v492 = vunpack.c.h.b16 %v201
    %v493 = vunpack.c.l.b16 %v202
    %v494 = vunpack.c.h.b16 %v202
    %v495 = vunpack.c.l.b16 %v203
    %v496 = vunpack.c.h.b16 %v203
    %v497 = vunpack.c.l.b16 %v204
    %v498 = vunpack.c.h.b16 %v204
    %v499 = vunpack.c.l.b16 %v205
    %v500 = vunpack.c.h.b16 %v205
    %v501 = vunpack.c.l.b16 %v206
    %v502 = vunpack.c.h.b16 %v206
    %v503 = vunpack.c.l.b16 %v207
    %v504 = vunpack.c.h.b16 %v207
    %v505 = vunpack.c.l.b16 %v208
    %v506 = vunpack.c.h.b16 %v208
    %v507 = vunpack.c.l.b16 %v209
    %v508 = vunpack.c.h.b16 %v209
    %v509 = vunpack.c.l.b16 %v210
    %v510 = vunpack.c.h.b16 %v210
    %v511 = vunpack.c.l.b16 %v211
    %v512 = vunpack.c.h.b16 %v211
    %v513 = vunpack.c.l.b16 %v212
    %v514 = vunpack.c.h.b16 %v212
    %v515 = vunpack.c.l.b16 %v213
    %v516 = vunpack.c.h.b16 %v213
    %v517 = vunpack.c.l.b16 %v214
    %v518 = vunpack.c.h.b16 %v214
    %v519 = vunpack.c.l.b16 %v215
    %v520 = vunpack.c.h.b16 %v215
    %v521 = vunpack.c.l.b16 %v216
    %v522 = vunpack.c.h.b16 %v216
    %v523 = vunpack.c.l.b16 %v217
    %v524 = vunpack.c.h.b16 %v217
    %v525 = vunpack.c.l.b16 %v218
    %v526 = vunpack.c.h.b16 %v218
    %v527 = vunpack.c.l.b16 %v219
    %v528 = vunpack.c.h.b16 %v219
    %v529 = vunpack.c.l.b16 %v220
    %v530 = vunpack.c.h.b16 %v220
    %v531 = vunpack.c.l.b16 %v221
    %v532 = vunpack.c.h.b16 %v221
    %v533 = vunpack.c.l.b16 %v222
    %v534 = vunpack.c.h.b16 %v222
    %v535 = vunpack.c.l.b16 %v223
    %v536 = vunpack.c.h.b16 %v223
    %v537 = vunpack.c.l.b16 %v224
    %v538 = vunpack.c.h.b16 %v224
    %v539 = vunpack.c.l.b16 %v225
    %v540 = vunpack.c.h.b16 %v225
    %v541 = vunpack.c.l.b16 %v226
    %v542 = vunpack.c.h.b16 %v226
    %v543 = vunpack.c.l.b16 %v227
    %v544 = vunpack.c.h.b16 %v227
    %v545 = vunpack.c.l.b16 %v228
    %v546 = vunpack.c.h.b16 %v228
    %v547 = vunpack.c.l.b16 %v229
    %v548 = vunpack.c.h.b16 %v229
    %v549 = vunpack.c.l.b16 %v230
    %v550 = vunpack.c.h.b16 %v230
    %v551 = vunpack.c.l.b16 %v231
    %v552 = vunpack.c.h.b16 %v231
    %v553 = vunpack.c.l.b16 %v232
    %v554 = vunpack.c.h.b16 %v232
    %v555 = vunpack.c.l.b16 %v233
    %v556 = vunpack.c.h.b16 %v233
    %v557 = vunpack.c.l.b16 %v234
    %v558 = vunpack.c.h.b16 %v234
    %v559 = vunpack.c.l.b16 %v235
    %v560 = vunpack.c.h.b16 %v235
    %v561 = vunpack.c.l.b16 %v236
    %v562 = vunpack.c.h.b16 %v236
    %v563 = vunpack.c.l.b16 %v237
    %v564 = vunpack.c.h.b16 %v237
    %v565 = vunpack.c.l.b16 %v238
    %v566 = vunpack.c.h.b16 %v238
    %v567 = vunpack.c.l.b16 %v239
    %v568 = vunpack.c.h.b16 %v239
    %v569 = vunpack.c.l.b16 %v240
    %v570 = vunpack.c.h.b16 %v240
    %v571 = vpack.c.b16 %v377, %v375
    %v572 = vpack.c.b16 %v378, %v376
    %v573 = vpack.c.b16 %v381, %v379
    %v574 = vpack.c.b16 %v382, %v380
    %v575 = vpack.c.b16 %v385, %v383
    %v576 = vpack.c.b16 %v386, %v384
    %v577 = vpack.c.b16 %v389, %v387
    %v578 = vpack.c.b16 %v390, %v388
    %v579 = vpack.c.b16 %v393, %v391
    %v580 = vpack.c.b16 %v394, %v392
    %v581 = vpack.c.b16 %v397, %v395
    %v582 = vpack.c.b16 %v398, %v396
    %v583 = vpack.c.b16 %v401, %v399
    %v584 = vpack.c.b16 %v402, %v400
    %v585 = vpack.c.b16 %v405, %v403
    %v586 = vpack.c.b16 %v406, %v404
    %v587 = vpack.c.b16 %v409, %v407
    %v588 = vpack.c.b16 %v410, %v408
    %v589 = vpack.c.b16 %v413, %v411
    %v590 = vpack.c.b16 %v414, %v412
    %v591 = vpack.c.b16 %v417, %v415
    %v592 = vpack.c.b16 %v418, %v416
    %v593 = vpack.c.b16 %v421, %v419
    %v594 = vpack.c.b16 %v422, %v420
    %v595 = vpack.c.b16 %v425, %v423
    %v596 = vpack.c.b16 %v426, %v424
    %v597 = vpack.c.b16 %v429, %v427
    %v598 = vpack.c.b16 %v430, %v428
    %v599 = vpack.c.b16 %v433, %v431
    %v600 = vpack.c.b16 %v434, %v432
    %v601 = vpack.c.b16 %v437, %v435
    %v602 = vpack.c.b16 %v438, %v436
    %v603 = vpack.c.b16 %v441, %v439
    %v604 = vpack.c.b16 %v442, %v440
    %v605 = vpack.c.b16 %v445, %v443
    %v606 = vpack.c.b16 %v446, %v444
    %v607 = vpack.c.b16 %v449, %v447
    %v608 = vpack.c.b16 %v450, %v448
    %v609 = vpack.c.b16 %v453, %v451
    %v610 = vpack.c.b16 %v454, %v452
    %v611 = vpack.c.b16 %v457, %v455
    %v612 = vpack.c.b16 %v458, %v456
    %v613 = vpack.c.b16 %v461, %v459
    %v614 = vpack.c.b16 %v462, %v460
    %v615 = vpack.c.b16 %v465, %v463
    %v616 = vpack.c.b16 %v466, %v464
    %v617 = vpack.c.b16 %v469, %v467
    %v618 = vpack.c.b16 %v470, %v468
    %v619 = vpack.c.b16 %v473, %v471
    %v620 = vpack.c.b16 %v474, %v472
    %v621 = vpack.c.b16 %v477, %v475
    %v622 = vpack.c.b16 %v478, %v476
    %v623 = vpack.c.b16 %v481, %v479
    %v624 = vpack.c.b16 %v482, %v480
    %v625 = vpack.c.b16 %v485, %v483
    %v626 = vpack.c.b16 %v486, %v484
    %v627 = vpack.c.b16 %v489, %v487
    %v628 = vpack.c.b16 %v490, %v488
    %v629 = vpack.c.b16 %v493, %v491
    %v630 = vpack.c.b16 %v494, %v492
    %v631 = vpack.c.b16 %v497, %v495
    %v632 = vpack.c.b16 %v498, %v496
    %v633 = vpack.c.b16 %v501, %v499
    %v634 = vpack.c.b16 %v502, %v500
    %v635 = vpack.c.b16 %v505, %v503
    %v636 = vpack.c.b16 %v506, %v504
    %v637 = vpack.c.b16 %v509, %v507
    %v638 = vpack.c.b16 %v510, %v508
    %v639 = vpack.c.b16 %v513, %v511
    %v640 = vpack.c.b16 %v514, %v512
    %v641 = vpack.c.b16 %v517, %v515
    %v642 = vpack.c.b16 %v518, %v516
    %v643 = vpack.c.b16 %v521, %v519
    %v644 = vpack.c.b16 %v522, %v520
    %v645 = vpack.c.b16 %v525, %v523
    %v646 = vpack.c.b16 %v526, %v524
    %v647 = vpack.c.b16 %v529, %v527
    %v648 = vpack.c.b16 %v530, %v528
    %v649 = vpack.c.b16 %v533, %v531
    %v650 = vpack.c.b16 %v534, %v532
    %v651 = vpack.c.b16 %v537, %v535
    %v652 = vpack.c.b16 %v538, %v536
    %v653 = vpack.c.b16 %v541, %v539
    %v654 = vpack.c.b16 %v542, %v540
    %v655 = vpack.c.b16 %v545, %v543
    %v656 = vpack.c.b16 %v546, %v544
    %v657 = vpack.c.b16 %v549, %v547
    %v658 = vpack.c.b16 %v550, %v548
    %v659 = vpack.c.b16 %v553, %v551
    %v660 = vpack.c.b16 %v554, %v552
    %v661 = vpack.c.b16 %v557, %v555
    %v662 = vpack.c.b16 %v558, %v556
    %v663 = vpack.c.b16 %v561, %v559
    %v664 = vpack.c.b16 %v562, %v560
    %v665 = vpack.c.b16 %v565, %v563
    %v666 = vpack.c.b16 %v566, %v564
    %v667 = vpack.c.b16 %v569, %v567
    %v668 = vpack.c.b16 %v570, %v568
    %vm767 = vcmask 130048
    %v769 = vsel %vm767, %v270, 0
    %771 = vmatprep.subr.bf16.mxu0 %v586
    %772 = vmatpush1.bf16.msra.mxu0 %v585
    %773 = vmatprep.subr.bf16.mxu0 %v584
    %774 = vmatpush1.bf16.msra.mxu0 %v583
    %775 = vmatprep.subr.bf16.mxu0 %v582
    %776 = vmatpush1.bf16.msra.mxu0 %v581
    %777 = vmatprep.subr.bf16.mxu0 %v580
    %778 = vmatpush1.bf16.msra.mxu0 %v579
    %779 = vmatprep.subr.bf16.mxu0 %v578
    %780 = vmatpush1.bf16.msra.mxu0 %v577
    %781 = vmatprep.subr.bf16.mxu0 %v576
    %782 = vmatpush1.bf16.msra.mxu0 %v575
    %783 = vmatprep.subr.bf16.mxu0 %v574
    %784 = vmatpush1.bf16.msra.mxu0 %v573
    %785 = vmatprep.subr.bf16.mxu0 %v572
    %786 = vmatpush1.bf16.msra.mxu0 %v571
    %787 = vmatprep.subr.bf16.mxu0 %v602
    %788 = vmatpush2.bf16.msra.mxu0 %v601
    %789 = vmatprep.subr.bf16.mxu0 %v600
    %790 = vmatpush2.bf16.msra.mxu0 %v599
    %791 = vmatprep.subr.bf16.mxu0 %v598
    %792 = vmatpush2.bf16.msra.mxu0 %v597
    %793 = vmatprep.subr.bf16.mxu0 %v596
    %794 = vmatpush2.bf16.msra.mxu0 %v595
    %795 = vmatprep.subr.bf16.mxu0 %v594
    %796 = vmatpush2.bf16.msra.mxu0 %v593
    %797 = vmatprep.subr.bf16.mxu0 %v592
    %798 = vmatpush2.bf16.msra.mxu0 %v591
    %799 = vmatprep.subr.bf16.mxu0 %v590
    %800 = vmatpush2.bf16.msra.mxu0 %v589
    %801 = vmatprep.subr.bf16.mxu0 %v588
    %802 = vmatpush2.bf16.msra.mxu0 %v587
    %803 = vmatprep.mubr.bf16.mxu0 %v265
    %804 = vmatmul.mubr.bf16.gmra.mxu0 %v264
    %v805 = vpop.f32.mrf.mxu0
    %v806 = vadd.f32 %v246, %v805
    %v807 = vpop.f32.mrf.mxu0
    %v808 = vadd.f32 %v250, %v807
    %v809 = vpop.f32.mrf.mxu0
    %v810 = vpop.f32.mrf.mxu0
    %811 = vdwg.mxu0
    %812 = vmatprep.subr.bf16.mxu0 %v618
    %813 = vmatpush1.bf16.msra.mxu0 %v617
    %814 = vmatprep.subr.bf16.mxu0 %v616
    %815 = vmatpush1.bf16.msra.mxu0 %v615
    %816 = vmatprep.subr.bf16.mxu0 %v614
    %817 = vmatpush1.bf16.msra.mxu0 %v613
    %818 = vmatprep.subr.bf16.mxu0 %v612
    %819 = vmatpush1.bf16.msra.mxu0 %v611
    %820 = vmatprep.subr.bf16.mxu0 %v610
    %821 = vmatpush1.bf16.msra.mxu0 %v609
    %822 = vmatprep.subr.bf16.mxu0 %v608
    %823 = vmatpush1.bf16.msra.mxu0 %v607
    %824 = vmatprep.subr.bf16.mxu0 %v606
    %825 = vmatpush1.bf16.msra.mxu0 %v605
    %826 = vmatprep.subr.bf16.mxu0 %v604
    %827 = vmatpush1.bf16.msra.mxu0 %v603
    %828 = vmatprep.subr.bf16.mxu0 %v634
    %829 = vmatpush2.bf16.msra.mxu0 %v633
    %830 = vmatprep.subr.bf16.mxu0 %v632
    %831 = vmatpush2.bf16.msra.mxu0 %v631
    %832 = vmatprep.subr.bf16.mxu0 %v630
    %833 = vmatpush2.bf16.msra.mxu0 %v629
    %834 = vmatprep.subr.bf16.mxu0 %v628
    %835 = vmatpush2.bf16.msra.mxu0 %v627
    %836 = vmatprep.subr.bf16.mxu0 %v626
    %837 = vmatpush2.bf16.msra.mxu0 %v625
    %838 = vmatprep.subr.bf16.mxu0 %v624
    %839 = vmatpush2.bf16.msra.mxu0 %v623
    %840 = vmatprep.subr.bf16.mxu0 %v622
    %841 = vmatpush2.bf16.msra.mxu0 %v621
    %842 = vmatprep.subr.bf16.mxu0 %v620
    %843 = vmatpush2.bf16.msra.mxu0 %v619
    %844 = vmatprep.mubr.bf16.mxu0 %v267
    %845 = vmatmul.mubr.bf16.gmra.mxu0 %v266
    %v846 = vpop.f32.mrf.mxu0
    %v847 = vadd.f32 %v806, %v846
    %v848 = vpop.f32.mrf.mxu0
    %v849 = vadd.f32 %v808, %v848
    %v850 = vpop.f32.mrf.mxu0
    %v851 = vpop.f32.mrf.mxu0
    %852 = vdwg.mxu0
    %853 = vmatprep.subr.bf16.mxu0 %v650
    %854 = vmatpush1.bf16.msra.mxu0 %v649
    %855 = vmatprep.subr.bf16.mxu0 %v648
    %856 = vmatpush1.bf16.msra.mxu0 %v647
    %857 = vmatprep.subr.bf16.mxu0 %v646
    %858 = vmatpush1.bf16.msra.mxu0 %v645
    %859 = vmatprep.subr.bf16.mxu0 %v644
    %860 = vmatpush1.bf16.msra.mxu0 %v643
    %861 = vmatprep.subr.bf16.mxu0 %v642
    %862 = vmatpush1.bf16.msra.mxu0 %v641
    %863 = vmatprep.subr.bf16.mxu0 %v640
    %864 = vmatpush1.bf16.msra.mxu0 %v639
    %865 = vmatprep.subr.bf16.mxu0 %v638
    %866 = vmatpush1.bf16.msra.mxu0 %v637
    %867 = vmatprep.subr.bf16.mxu0 %v636
    %868 = vmatpush1.bf16.msra.mxu0 %v635
    %869 = vmatprep.subr.bf16.mxu0 %v666
    %870 = vmatpush2.bf16.msra.mxu0 %v665
    %871 = vmatprep.subr.bf16.mxu0 %v664
    %872 = vmatpush2.bf16.msra.mxu0 %v663
    %873 = vmatprep.subr.bf16.mxu0 %v662
    %874 = vmatpush2.bf16.msra.mxu0 %v661
    %875 = vmatprep.subr.bf16.mxu0 %v660
    %876 = vmatpush2.bf16.msra.mxu0 %v659
    %877 = vmatprep.subr.bf16.mxu0 %v658
    %878 = vmatpush2.bf16.msra.mxu0 %v657
    %879 = vmatprep.subr.bf16.mxu0 %v656
    %880 = vmatpush2.bf16.msra.mxu0 %v655
    %881 = vmatprep.subr.bf16.mxu0 %v654
    %882 = vmatpush2.bf16.msra.mxu0 %v653
    %883 = vmatprep.subr.bf16.mxu0 %v652
    %884 = vmatpush2.bf16.msra.mxu0 %v651
    %885 = vmatprep.mubr.bf16.mxu0 %v269
    %886 = vmatmul.mubr.bf16.gmra.mxu0 %v268
    %v887 = vpop.f32.mrf.mxu0
    %v888 = vadd.f32 %v847, %v887
    %v889 = vpop.f32.mrf.mxu0
    %v890 = vadd.f32 %v849, %v889
    %v891 = vpop.f32.mrf.mxu0
    %v892 = vpop.f32.mrf.mxu0
    %893 = vdwg.mxu0
    %894 = vmatprep.subr.bf16.mxu0 0
    %895 = vmatpush1.bf16.msra.mxu0 0
    %896 = vmatprep.subr.bf16.mxu0 0
    %897 = vmatpush1.bf16.msra.mxu0 0
    %898 = vmatprep.subr.bf16.mxu0 0
    %899 = vmatpush1.bf16.msra.mxu0 0
    %900 = vmatprep.subr.bf16.mxu0 0
    %901 = vmatpush1.bf16.msra.mxu0 0
    %902 = vmatprep.subr.bf16.mxu0 0
    %903 = vmatpush1.bf16.msra.mxu0 0
    %904 = vmatprep.subr.bf16.mxu0 0
    %905 = vmatpush1.bf16.msra.mxu0 0
    %906 = vmatprep.subr.bf16.mxu0 0
    %907 = vmatpush1.bf16.msra.mxu0 0
    %908 = vmatprep.subr.bf16.mxu0 %v668
    %909 = vmatpush1.bf16.msra.mxu0 %v667
    %910 = vmatprep.subr.bf16.mxu0 0
    %911 = vmatpush2.bf16.msra.mxu0 0
    %912 = vmatprep.subr.bf16.mxu0 0
    %913 = vmatpush2.bf16.msra.mxu0 0
    %914 = vmatprep.subr.bf16.mxu0 0
    %915 = vmatpush2.bf16.msra.mxu0 0
    %916 = vmatprep.subr.bf16.mxu0 0
    %917 = vmatpush2.bf16.msra.mxu0 0
    %918 = vmatprep.subr.bf16.mxu0 0
    %919 = vmatpush2.bf16.msra.mxu0 0
    %920 = vmatprep.subr.bf16.mxu0 0
    %921 = vmatpush2.bf16.msra.mxu0 0
    %922 = vmatprep.subr.bf16.mxu0 0
    %923 = vmatpush2.bf16.msra.mxu0 0
    %924 = vmatprep.subr.bf16.mxu0 0
    %925 = vmatpush2.bf16.msra.mxu0 0
    %926 = vmatprep.mubr.bf16.mxu0 0
    %927 = vmatmul.mubr.bf16.gmra.mxu0 %v769
    %v928 = vpop.f32.mrf.mxu0
    %v929 = vadd.f32 %v888, %v928
    %v930 = vpop.f32.mrf.mxu0
    %v931 = vadd.f32 %v890, %v930
    %v932 = vpop.f32.mrf.mxu0
    %v933 = vpop.f32.mrf.mxu0
    %934 = vdwg.mxu0
    %v935 = vmax.f32 %v929, 0.0
    %v936 = vmax.f32 %v931, 0.0
    %v937 = vpack.c.bf16 %v935, %v935
    %v938 = vpack.c.bf16 %v936, %v936
    %v939 = vld [vmem:[#allocation7] sm:$0xff]
    %v940 = vld [vmem:[#allocation7 + $0x8] sm:$0xff]
    %v941 = vld [vmem:[#allocation7 + $0x10] sm:$0xff]
    %v942 = vld [vmem:[#allocation7 + $0x18] sm:$0xff]
    %v943 = vld [vmem:[#allocation7 + $0x20] sm:$0xff]
    %v944 = vld [vmem:[#allocation7 + $0x28] sm:$0xff]
    %v945 = vld [vmem:[#allocation7 + $0x30] sm:$0xff]
    %v946 = vld [vmem:[#allocation7 + $0x38] sm:$0xff]
    %v947 = vld [vmem:[#allocation7 + $0x40] sm:$0xff]
    %v948 = vld [vmem:[#allocation7 + $0x48] sm:$0xff]
    %v949 = vld [vmem:[#allocation7 + $0x50] sm:$0xff]
    %v950 = vld [vmem:[#allocation7 + $0x58] sm:$0xff]
    %v951 = vld [vmem:[#allocation7 + $0x60] sm:$0xff]
    %v952 = vld [vmem:[#allocation7 + $0x68] sm:$0xff]
    %v953 = vld [vmem:[#allocation7 + $0x70] sm:$0xff]
    %v954 = vld [vmem:[#allocation7 + $0x78] sm:$0xff]
    %v955 = vld [vmem:[#allocation7 + $0x80] sm:$0xff]
    %v956 = vld [vmem:[#allocation7 + $0x88] sm:$0xff]
    %v957 = vld [vmem:[#allocation7 + $0x90] sm:$0xff]
    %v958 = vld [vmem:[#allocation7 + $0x98] sm:$0xff]
    %v959 = vld [vmem:[#allocation7 + $0xa0] sm:$0xff]
    %v960 = vld [vmem:[#allocation7 + $0xa8] sm:$0xff]
    %v961 = vld [vmem:[#allocation7 + $0xb0] sm:$0xff]
    %v962 = vld [vmem:[#allocation7 + $0xb8] sm:$0xff]
    %v963 = vld [vmem:[#allocation7 + $0xc0] sm:$0xff]
    %v964 = vld [vmem:[#allocation7 + $0xc8] sm:$0xff]
    %v965 = vld [vmem:[#allocation7 + $0xd0] sm:$0xff]
    %v966 = vld [vmem:[#allocation7 + $0xd8] sm:$0xff]
    %v967 = vld [vmem:[#allocation7 + $0xe0] sm:$0xff]
    %v968 = vld [vmem:[#allocation7 + $0xe8] sm:$0xff]
    %v969 = vld [vmem:[#allocation7 + $0xf0] sm:$0xff]
    %v970 = vld [vmem:[#allocation7 + $0xf8] sm:$0xff]
    %v971 = vld [vmem:[%s8] sm:$0x3]
    %v973 = vlaneseq
    %v974 = vshrl.u32 %v973, 7
    %v975 = vsub.s32 0, %v974
    %v976 = vrot.slane %v971, %v975
    %v977 = vlaneseq
    %v978 = vshrl.u32 %v977, 7
    %v979 = vsub.s32 1, %v978
    %v980 = vrot.slane %v971, %v979
    %v1015 = vunpack.c.l.b16 %v939
    %v1016 = vunpack.c.h.b16 %v939
    %v1017 = vunpack.c.l.b16 %v940
    %v1018 = vunpack.c.h.b16 %v940
    %v1019 = vunpack.c.l.b16 %v941
    %v1020 = vunpack.c.h.b16 %v941
    %v1021 = vunpack.c.l.b16 %v942
    %v1022 = vunpack.c.h.b16 %v942
    %v1023 = vunpack.c.l.b16 %v943
    %v1024 = vunpack.c.h.b16 %v943
    %v1025 = vunpack.c.l.b16 %v944
    %v1026 = vunpack.c.h.b16 %v944
    %v1027 = vunpack.c.l.b16 %v945
    %v1028 = vunpack.c.h.b16 %v945
    %v1029 = vunpack.c.l.b16 %v946
    %v1030 = vunpack.c.h.b16 %v946
    %v1031 = vunpack.c.l.b16 %v947
    %v1032 = vunpack.c.h.b16 %v947
    %v1033 = vunpack.c.l.b16 %v948
    %v1034 = vunpack.c.h.b16 %v948
    %v1035 = vunpack.c.l.b16 %v949
    %v1036 = vunpack.c.h.b16 %v949
    %v1037 = vunpack.c.l.b16 %v950
    %v1038 = vunpack.c.h.b16 %v950
    %v1039 = vunpack.c.l.b16 %v951
    %v1040 = vunpack.c.h.b16 %v951
    %v1041 = vunpack.c.l.b16 %v952
    %v1042 = vunpack.c.h.b16 %v952
    %v1043 = vunpack.c.l.b16 %v953
    %v1044 = vunpack.c.h.b16 %v953
    %v1045 = vunpack.c.l.b16 %v954
    %v1046 = vunpack.c.h.b16 %v954
    %v1047 = vunpack.c.l.b16 %v955
    %v1048 = vunpack.c.h.b16 %v955
    %v1049 = vunpack.c.l.b16 %v956
    %v1050 = vunpack.c.h.b16 %v956
    %v1051 = vunpack.c.l.b16 %v957
    %v1052 = vunpack.c.h.b16 %v957
    %v1053 = vunpack.c.l.b16 %v958
    %v1054 = vunpack.c.h.b16 %v958
    %v1055 = vunpack.c.l.b16 %v959
    %v1056 = vunpack.c.h.b16 %v959
    %v1057 = vunpack.c.l.b16 %v960
    %v1058 = vunpack.c.h.b16 %v960
    %v1059 = vunpack.c.l.b16 %v961
    %v1060 = vunpack.c.h.b16 %v961
    %v1061 = vunpack.c.l.b16 %v962
    %v1062 = vunpack.c.h.b16 %v962
    %v1063 = vunpack.c.l.b16 %v963
    %v1064 = vunpack.c.h.b16 %v963
    %v1065 = vunpack.c.l.b16 %v964
    %v1066 = vunpack.c.h.b16 %v964
    %v1067 = vunpack.c.l.b16 %v965
    %v1068 = vunpack.c.h.b16 %v965
    %v1069 = vunpack.c.l.b16 %v966
    %v1070 = vunpack.c.h.b16 %v966
    %v1071 = vunpack.c.l.b16 %v967
    %v1072 = vunpack.c.h.b16 %v967
    %v1073 = vunpack.c.l.b16 %v968
    %v1074 = vunpack.c.h.b16 %v968
    %v1075 = vunpack.c.l.b16 %v969
    %v1076 = vunpack.c.h.b16 %v969
    %v1077 = vunpack.c.l.b16 %v970
    %v1078 = vunpack.c.h.b16 %v970
    %v1079 = vpack.c.b16 %v1017, %v1015
    %v1080 = vpack.c.b16 %v1018, %v1016
    %v1081 = vpack.c.b16 %v1021, %v1019
    %v1082 = vpack.c.b16 %v1022, %v1020
    %v1083 = vpack.c.b16 %v1025, %v1023
    %v1084 = vpack.c.b16 %v1026, %v1024
    %v1085 = vpack.c.b16 %v1029, %v1027
    %v1086 = vpack.c.b16 %v1030, %v1028
    %v1087 = vpack.c.b16 %v1033, %v1031
    %v1088 = vpack.c.b16 %v1034, %v1032
    %v1089 = vpack.c.b16 %v1037, %v1035
    %v1090 = vpack.c.b16 %v1038, %v1036
    %v1091 = vpack.c.b16 %v1041, %v1039
    %v1092 = vpack.c.b16 %v1042, %v1040
    %v1093 = vpack.c.b16 %v1045, %v1043
    %v1094 = vpack.c.b16 %v1046, %v1044
    %v1095 = vpack.c.b16 %v1049, %v1047
    %v1096 = vpack.c.b16 %v1050, %v1048
    %v1097 = vpack.c.b16 %v1053, %v1051
    %v1098 = vpack.c.b16 %v1054, %v1052
    %v1099 = vpack.c.b16 %v1057, %v1055
    %v1100 = vpack.c.b16 %v1058, %v1056
    %v1101 = vpack.c.b16 %v1061, %v1059
    %v1102 = vpack.c.b16 %v1062, %v1060
    %v1103 = vpack.c.b16 %v1065, %v1063
    %v1104 = vpack.c.b16 %v1066, %v1064
    %v1105 = vpack.c.b16 %v1069, %v1067
    %v1106 = vpack.c.b16 %v1070, %v1068
    %v1107 = vpack.c.b16 %v1073, %v1071
    %v1108 = vpack.c.b16 %v1074, %v1072
    %v1109 = vpack.c.b16 %v1077, %v1075
    %v1110 = vpack.c.b16 %v1078, %v1076
    %1143 = vmatprep.subr.bf16.mxu0 %v1094
    %1144 = vmatpush1.bf16.msra.mxu0 %v1093
    %1145 = vmatprep.subr.bf16.mxu0 %v1092
    %1146 = vmatpush1.bf16.msra.mxu0 %v1091
    %1147 = vmatprep.subr.bf16.mxu0 %v1090
    %1148 = vmatpush1.bf16.msra.mxu0 %v1089
    %1149 = vmatprep.subr.bf16.mxu0 %v1088
    %1150 = vmatpush1.bf16.msra.mxu0 %v1087
    %1151 = vmatprep.subr.bf16.mxu0 %v1086
    %1152 = vmatpush1.bf16.msra.mxu0 %v1085
    %1153 = vmatprep.subr.bf16.mxu0 %v1084
    %1154 = vmatpush1.bf16.msra.mxu0 %v1083
    %1155 = vmatprep.subr.bf16.mxu0 %v1082
    %1156 = vmatpush1.bf16.msra.mxu0 %v1081
    %1157 = vmatprep.subr.bf16.mxu0 %v1080
    %1158 = vmatpush1.bf16.msra.mxu0 %v1079
    %1159 = vmatprep.subr.bf16.mxu0 %v1110
    %1160 = vmatpush2.bf16.msra.mxu0 %v1109
    %1161 = vmatprep.subr.bf16.mxu0 %v1108
    %1162 = vmatpush2.bf16.msra.mxu0 %v1107
    %1163 = vmatprep.subr.bf16.mxu0 %v1106
    %1164 = vmatpush2.bf16.msra.mxu0 %v1105
    %1165 = vmatprep.subr.bf16.mxu0 %v1104
    %1166 = vmatpush2.bf16.msra.mxu0 %v1103
    %1167 = vmatprep.subr.bf16.mxu0 %v1102
    %1168 = vmatpush2.bf16.msra.mxu0 %v1101
    %1169 = vmatprep.subr.bf16.mxu0 %v1100
    %1170 = vmatpush2.bf16.msra.mxu0 %v1099
    %1171 = vmatprep.subr.bf16.mxu0 %v1098
    %1172 = vmatpush2.bf16.msra.mxu0 %v1097
    %1173 = vmatprep.subr.bf16.mxu0 %v1096
    %1174 = vmatpush2.bf16.msra.mxu0 %v1095
    %1175 = vmatprep.mubr.bf16.mxu0 %v938
    %1176 = vmatmul.mubr.bf16.gmra.mxu0 %v937
    %v1177 = vpop.f32.mrf.mxu0
    %v1178 = vadd.f32 %v976, %v1177
    %v1179 = vpop.f32.mrf.mxu0
    %v1180 = vadd.f32 %v980, %v1179
    %v1181 = vpop.f32.mrf.mxu0
    %v1182 = vpop.f32.mrf.mxu0
    %1183 = vdwg.mxu0
    %v1184 = vmax.f32 %v1178, 0.0
    %v1185 = vmax.f32 %v1180, 0.0
    %v1186 = vpack.c.bf16 %v1184, %v1184
    %v1187 = vpack.c.bf16 %v1185, %v1185
    %v1188 = vld [vmem:[#allocation8] sm:$0xff]
    %v1189 = vld [vmem:[#allocation8 + $0x8] sm:$0xff]
    %v1190 = vld [vmem:[#allocation8 + $0x10] sm:$0xff]
    %v1191 = vld [vmem:[#allocation8 + $0x18] sm:$0xff]
    %v1192 = vld [vmem:[#allocation8 + $0x20] sm:$0xff]
    %v1193 = vld [vmem:[#allocation8 + $0x28] sm:$0xff]
    %v1194 = vld [vmem:[#allocation8 + $0x30] sm:$0xff]
    %v1195 = vld [vmem:[#allocation8 + $0x38] sm:$0xff]
    %v1196 = vld [vmem:[#allocation8 + $0x40] sm:$0xff]
    %v1197 = vld [vmem:[#allocation8 + $0x48] sm:$0xff]
    %v1198 = vld [vmem:[#allocation8 + $0x50] sm:$0xff]
    %v1199 = vld [vmem:[#allocation8 + $0x58] sm:$0xff]
    %v1200 = vld [vmem:[#allocation8 + $0x60] sm:$0xff]
    %v1201 = vld [vmem:[#allocation8 + $0x68] sm:$0xff]
    %v1202 = vld [vmem:[#allocation8 + $0x70] sm:$0xff]
    %v1203 = vld [vmem:[#allocation8 + $0x78] sm:$0xff]
    %v1204 = vld [vmem:[#allocation8 + $0x80] sm:$0xff]
    %v1205 = vld [vmem:[#allocation8 + $0x88] sm:$0xff]
    %v1206 = vld [vmem:[#allocation8 + $0x90] sm:$0xff]
    %v1207 = vld [vmem:[#allocation8 + $0x98] sm:$0xff]
    %v1208 = vld [vmem:[#allocation8 + $0xa0] sm:$0xff]
    %v1209 = vld [vmem:[#allocation8 + $0xa8] sm:$0xff]
    %v1210 = vld [vmem:[#allocation8 + $0xb0] sm:$0xff]
    %v1211 = vld [vmem:[#allocation8 + $0xb8] sm:$0xff]
    %v1212 = vld [vmem:[#allocation8 + $0xc0] sm:$0xff]
    %v1213 = vld [vmem:[#allocation8 + $0xc8] sm:$0xff]
    %v1214 = vld [vmem:[#allocation8 + $0xd0] sm:$0xff]
    %v1215 = vld [vmem:[#allocation8 + $0xd8] sm:$0xff]
    %v1216 = vld [vmem:[#allocation8 + $0xe0] sm:$0xff]
    %v1217 = vld [vmem:[#allocation8 + $0xe8] sm:$0xff]
    %v1218 = vld [vmem:[#allocation8 + $0xf0] sm:$0xff]
    %v1219 = vld [vmem:[#allocation8 + $0xf8] sm:$0xff]
    %v1220 = vld [vmem:[%s9] sm:$0x3]
    %v1222 = vlaneseq
    %v1223 = vshrl.u32 %v1222, 7
    %v1224 = vsub.s32 0, %v1223
    %v1225 = vrot.slane %v1220, %v1224
    %v1226 = vlaneseq
    %v1227 = vshrl.u32 %v1226, 7
    %v1228 = vsub.s32 1, %v1227
    %v1229 = vrot.slane %v1220, %v1228
    %v1264 = vunpack.c.l.b16 %v1188
    %v1265 = vunpack.c.h.b16 %v1188
    %v1266 = vunpack.c.l.b16 %v1189
    %v1267 = vunpack.c.h.b16 %v1189
    %v1268 = vunpack.c.l.b16 %v1190
    %v1269 = vunpack.c.h.b16 %v1190
    %v1270 = vunpack.c.l.b16 %v1191
    %v1271 = vunpack.c.h.b16 %v1191
    %v1272 = vunpack.c.l.b16 %v1192
    %v1273 = vunpack.c.h.b16 %v1192
    %v1274 = vunpack.c.l.b16 %v1193
    %v1275 = vunpack.c.h.b16 %v1193
    %v1276 = vunpack.c.l.b16 %v1194
    %v1277 = vunpack.c.h.b16 %v1194
    %v1278 = vunpack.c.l.b16 %v1195
    %v1279 = vunpack.c.h.b16 %v1195
    %v1280 = vunpack.c.l.b16 %v1196
    %v1281 = vunpack.c.h.b16 %v1196
    %v1282 = vunpack.c.l.b16 %v1197
    %v1283 = vunpack.c.h.b16 %v1197
    %v1284 = vunpack.c.l.b16 %v1198
    %v1285 = vunpack.c.h.b16 %v1198
    %v1286 = vunpack.c.l.b16 %v1199
    %v1287 = vunpack.c.h.b16 %v1199
    %v1288 = vunpack.c.l.b16 %v1200
    %v1289 = vunpack.c.h.b16 %v1200
    %v1290 = vunpack.c.l.b16 %v1201
    %v1291 = vunpack.c.h.b16 %v1201
    %v1292 = vunpack.c.l.b16 %v1202
    %v1293 = vunpack.c.h.b16 %v1202
    %v1294 = vunpack.c.l.b16 %v1203
    %v1295 = vunpack.c.h.b16 %v1203
    %v1296 = vunpack.c.l.b16 %v1204
    %v1297 = vunpack.c.h.b16 %v1204
    %v1298 = vunpack.c.l.b16 %v1205
    %v1299 = vunpack.c.h.b16 %v1205
    %v1300 = vunpack.c.l.b16 %v1206
    %v1301 = vunpack.c.h.b16 %v1206
    %v1302 = vunpack.c.l.b16 %v1207
    %v1303 = vunpack.c.h.b16 %v1207
    %v1304 = vunpack.c.l.b16 %v1208
    %v1305 = vunpack.c.h.b16 %v1208
    %v1306 = vunpack.c.l.b16 %v1209
    %v1307 = vunpack.c.h.b16 %v1209
    %v1308 = vunpack.c.l.b16 %v1210
    %v1309 = vunpack.c.h.b16 %v1210
    %v1310 = vunpack.c.l.b16 %v1211
    %v1311 = vunpack.c.h.b16 %v1211
    %v1312 = vunpack.c.l.b16 %v1212
    %v1313 = vunpack.c.h.b16 %v1212
    %v1314 = vunpack.c.l.b16 %v1213
    %v1315 = vunpack.c.h.b16 %v1213
    %v1316 = vunpack.c.l.b16 %v1214
    %v1317 = vunpack.c.h.b16 %v1214
    %v1318 = vunpack.c.l.b16 %v1215
    %v1319 = vunpack.c.h.b16 %v1215
    %v1320 = vunpack.c.l.b16 %v1216
    %v1321 = vunpack.c.h.b16 %v1216
    %v1322 = vunpack.c.l.b16 %v1217
    %v1323 = vunpack.c.h.b16 %v1217
    %v1324 = vunpack.c.l.b16 %v1218
    %v1325 = vunpack.c.h.b16 %v1218
    %v1326 = vunpack.c.l.b16 %v1219
    %v1327 = vunpack.c.h.b16 %v1219
    %v1328 = vpack.c.b16 %v1266, %v1264
    %v1329 = vpack.c.b16 %v1267, %v1265
    %v1330 = vpack.c.b16 %v1270, %v1268
    %v1331 = vpack.c.b16 %v1271, %v1269
    %v1332 = vpack.c.b16 %v1274, %v1272
    %v1333 = vpack.c.b16 %v1275, %v1273
    %v1334 = vpack.c.b16 %v1278, %v1276
    %v1335 = vpack.c.b16 %v1279, %v1277
    %v1336 = vpack.c.b16 %v1282, %v1280
    %v1337 = vpack.c.b16 %v1283, %v1281
    %v1338 = vpack.c.b16 %v1286, %v1284
    %v1339 = vpack.c.b16 %v1287, %v1285
    %v1340 = vpack.c.b16 %v1290, %v1288
    %v1341 = vpack.c.b16 %v1291, %v1289
    %v1342 = vpack.c.b16 %v1294, %v1292
    %v1343 = vpack.c.b16 %v1295, %v1293
    %v1344 = vpack.c.b16 %v1298, %v1296
    %v1345 = vpack.c.b16 %v1299, %v1297
    %v1346 = vpack.c.b16 %v1302, %v1300
    %v1347 = vpack.c.b16 %v1303, %v1301
    %v1348 = vpack.c.b16 %v1306, %v1304
    %v1349 = vpack.c.b16 %v1307, %v1305
    %v1350 = vpack.c.b16 %v1310, %v1308
    %v1351 = vpack.c.b16 %v1311, %v1309
    %v1352 = vpack.c.b16 %v1314, %v1312
    %v1353 = vpack.c.b16 %v1315, %v1313
    %v1354 = vpack.c.b16 %v1318, %v1316
    %v1355 = vpack.c.b16 %v1319, %v1317
    %v1356 = vpack.c.b16 %v1322, %v1320
    %v1357 = vpack.c.b16 %v1323, %v1321
    %v1358 = vpack.c.b16 %v1326, %v1324
    %v1359 = vpack.c.b16 %v1327, %v1325
    %1392 = vmatprep.subr.bf16.mxu0 %v1343
    %1393 = vmatpush1.bf16.msra.mxu0 %v1342
    %1394 = vmatprep.subr.bf16.mxu0 %v1341
    %1395 = vmatpush1.bf16.msra.mxu0 %v1340
    %1396 = vmatprep.subr.bf16.mxu0 %v1339
    %1397 = vmatpush1.bf16.msra.mxu0 %v1338
    %1398 = vmatprep.subr.bf16.mxu0 %v1337
    %1399 = vmatpush1.bf16.msra.mxu0 %v1336
    %1400 = vmatprep.subr.bf16.mxu0 %v1335
    %1401 = vmatpush1.bf16.msra.mxu0 %v1334
    %1402 = vmatprep.subr.bf16.mxu0 %v1333
    %1403 = vmatpush1.bf16.msra.mxu0 %v1332
    %1404 = vmatprep.subr.bf16.mxu0 %v1331
    %1405 = vmatpush1.bf16.msra.mxu0 %v1330
    %1406 = vmatprep.subr.bf16.mxu0 %v1329
    %1407 = vmatpush1.bf16.msra.mxu0 %v1328
    %1408 = vmatprep.subr.bf16.mxu0 %v1359
    %1409 = vmatpush2.bf16.msra.mxu0 %v1358
    %1410 = vmatprep.subr.bf16.mxu0 %v1357
    %1411 = vmatpush2.bf16.msra.mxu0 %v1356
    %1412 = vmatprep.subr.bf16.mxu0 %v1355
    %1413 = vmatpush2.bf16.msra.mxu0 %v1354
    %1414 = vmatprep.subr.bf16.mxu0 %v1353
    %1415 = vmatpush2.bf16.msra.mxu0 %v1352
    %1416 = vmatprep.subr.bf16.mxu0 %v1351
    %1417 = vmatpush2.bf16.msra.mxu0 %v1350
    %1418 = vmatprep.subr.bf16.mxu0 %v1349
    %1419 = vmatpush2.bf16.msra.mxu0 %v1348
    %1420 = vmatprep.subr.bf16.mxu0 %v1347
    %1421 = vmatpush2.bf16.msra.mxu0 %v1346
    %1422 = vmatprep.subr.bf16.mxu0 %v1345
    %1423 = vmatpush2.bf16.msra.mxu0 %v1344
    %1424 = vmatprep.mubr.bf16.mxu0 %v1187
    %1425 = vmatmul.mubr.bf16.gmra.mxu0 %v1186
    %v1426 = vpop.f32.mrf.mxu0
    %v1427 = vadd.f32 %v1225, %v1426
    %v1428 = vpop.f32.mrf.mxu0
    %v1429 = vadd.f32 %v1229, %v1428
    %v1430 = vpop.f32.mrf.mxu0
    %v1431 = vpop.f32.mrf.mxu0
    %1432 = vdwg.mxu0
    %v1433 = vmax.f32 %v1427, 0.0
    %v1434 = vmax.f32 %v1429, 0.0
    %v1435 = vpack.c.bf16 %v1433, %v1433
    %v1436 = vpack.c.bf16 %v1434, %v1434
    %v1437 = vld [vmem:[#allocation10] sm:$0xf]
    %v1438 = vld [vmem:[#allocation10 + $0x4] sm:$0xf]
    %v1439 = vld [vmem:[#allocation10 + $0x8] sm:$0xf]
    %v1440 = vld [vmem:[#allocation10 + $0xc] sm:$0xf]
    %v1441 = vld [vmem:[#allocation10 + $0x10] sm:$0xf]
    %v1442 = vld [vmem:[#allocation10 + $0x14] sm:$0xf]
    %v1443 = vld [vmem:[#allocation10 + $0x18] sm:$0xf]
    %v1444 = vld [vmem:[#allocation10 + $0x1c] sm:$0xf]
    %v1445 = vld [vmem:[#allocation10 + $0x20] sm:$0xf]
    %v1446 = vld [vmem:[#allocation10 + $0x24] sm:$0xf]
    %v1447 = vld [vmem:[#allocation10 + $0x28] sm:$0xf]
    %v1448 = vld [vmem:[#allocation10 + $0x2c] sm:$0xf]
    %v1449 = vld [vmem:[#allocation10 + $0x30] sm:$0xf]
    %v1450 = vld [vmem:[#allocation10 + $0x34] sm:$0xf]
    %v1451 = vld [vmem:[#allocation10 + $0x38] sm:$0xf]
    %v1452 = vld [vmem:[#allocation10 + $0x3c] sm:$0xf]
    %v1453 = vld [vmem:[#allocation10 + $0x40] sm:$0xf]
    %v1454 = vld [vmem:[#allocation10 + $0x44] sm:$0xf]
    %v1455 = vld [vmem:[#allocation10 + $0x48] sm:$0xf]
    %v1456 = vld [vmem:[#allocation10 + $0x4c] sm:$0xf]
    %v1457 = vld [vmem:[#allocation10 + $0x50] sm:$0xf]
    %v1458 = vld [vmem:[#allocation10 + $0x54] sm:$0xf]
    %v1459 = vld [vmem:[#allocation10 + $0x58] sm:$0xf]
    %v1460 = vld [vmem:[#allocation10 + $0x5c] sm:$0xf]
    %v1461 = vld [vmem:[#allocation10 + $0x60] sm:$0xf]
    %v1462 = vld [vmem:[#allocation10 + $0x64] sm:$0xf]
    %v1463 = vld [vmem:[#allocation10 + $0x68] sm:$0xf]
    %v1464 = vld [vmem:[#allocation10 + $0x6c] sm:$0xf]
    %v1465 = vld [vmem:[#allocation10 + $0x70] sm:$0xf]
    %v1466 = vld [vmem:[#allocation10 + $0x74] sm:$0xf]
    %v1467 = vld [vmem:[#allocation10 + $0x78] sm:$0xf]
    %v1468 = vld [vmem:[#allocation10 + $0x7c] sm:$0xf]
    %v1469 = vld [vmem:[%s10] sm:$0x1]
    %v1471 = vlaneseq
    %v1472 = vshrl.u32 %v1471, 7
    %v1473 = vsub.s32 0, %v1472
    %v1474 = vrot.slane %v1469, %v1473
    %v1508 = vunpack.c.l.b16 %v1437
    %v1509 = vunpack.c.l.b16 %v1438
    %v1510 = vunpack.c.l.b16 %v1439
    %v1511 = vunpack.c.l.b16 %v1440
    %v1512 = vunpack.c.l.b16 %v1441
    %v1513 = vunpack.c.l.b16 %v1442
    %v1514 = vunpack.c.l.b16 %v1443
    %v1515 = vunpack.c.l.b16 %v1444
    %v1516 = vunpack.c.l.b16 %v1445
    %v1517 = vunpack.c.l.b16 %v1446
    %v1518 = vunpack.c.l.b16 %v1447
    %v1519 = vunpack.c.l.b16 %v1448
    %v1520 = vunpack.c.l.b16 %v1449
    %v1521 = vunpack.c.l.b16 %v1450
    %v1522 = vunpack.c.l.b16 %v1451
    %v1523 = vunpack.c.l.b16 %v1452
    %v1524 = vunpack.c.l.b16 %v1453
    %v1525 = vunpack.c.l.b16 %v1454
    %v1526 = vunpack.c.l.b16 %v1455
    %v1527 = vunpack.c.l.b16 %v1456
    %v1528 = vunpack.c.l.b16 %v1457
    %v1529 = vunpack.c.l.b16 %v1458
    %v1530 = vunpack.c.l.b16 %v1459
    %v1531 = vunpack.c.l.b16 %v1460
    %v1532 = vunpack.c.l.b16 %v1461
    %v1533 = vunpack.c.l.b16 %v1462
    %v1534 = vunpack.c.l.b16 %v1463
    %v1535 = vunpack.c.l.b16 %v1464
    %v1536 = vunpack.c.l.b16 %v1465
    %v1537 = vunpack.c.l.b16 %v1466
    %v1538 = vunpack.c.l.b16 %v1467
    %v1539 = vunpack.c.l.b16 %v1468
    %v1540 = vpack.c.b16 %v1509, %v1508
    %v1541 = vpack.c.b16 %v1511, %v1510
    %v1542 = vpack.c.b16 %v1513, %v1512
    %v1543 = vpack.c.b16 %v1515, %v1514
    %v1544 = vpack.c.b16 %v1517, %v1516
    %v1545 = vpack.c.b16 %v1519, %v1518
    %v1546 = vpack.c.b16 %v1521, %v1520
    %v1547 = vpack.c.b16 %v1523, %v1522
    %v1548 = vpack.c.b16 %v1525, %v1524
    %v1549 = vpack.c.b16 %v1527, %v1526
    %v1550 = vpack.c.b16 %v1529, %v1528
    %v1551 = vpack.c.b16 %v1531, %v1530
    %v1552 = vpack.c.b16 %v1533, %v1532
    %v1553 = vpack.c.b16 %v1535, %v1534
    %v1554 = vpack.c.b16 %v1537, %v1536
    %v1555 = vpack.c.b16 %v1539, %v1538
    %1572 = vmatprep.subr.bf16.mxu0 0
    %1573 = vmatpush1.bf16.msra.mxu0 %v1547
    %1574 = vmatprep.subr.bf16.mxu0 0
    %1575 = vmatpush1.bf16.msra.mxu0 %v1546
    %1576 = vmatprep.subr.bf16.mxu0 0
    %1577 = vmatpush1.bf16.msra.mxu0 %v1545
    %1578 = vmatprep.subr.bf16.mxu0 0
    %1579 = vmatpush1.bf16.msra.mxu0 %v1544
    %1580 = vmatprep.subr.bf16.mxu0 0
    %1581 = vmatpush1.bf16.msra.mxu0 %v1543
    %1582 = vmatprep.subr.bf16.mxu0 0
    %1583 = vmatpush1.bf16.msra.mxu0 %v1542
    %1584 = vmatprep.subr.bf16.mxu0 0
    %1585 = vmatpush1.bf16.msra.mxu0 %v1541
    %1586 = vmatprep.subr.bf16.mxu0 0
    %1587 = vmatpush1.bf16.msra.mxu0 %v1540
    %1588 = vmatprep.subr.bf16.mxu0 0
    %1589 = vmatpush2.bf16.msra.mxu0 %v1555
    %1590 = vmatprep.subr.bf16.mxu0 0
    %1591 = vmatpush2.bf16.msra.mxu0 %v1554
    %1592 = vmatprep.subr.bf16.mxu0 0
    %1593 = vmatpush2.bf16.msra.mxu0 %v1553
    %1594 = vmatprep.subr.bf16.mxu0 0
    %1595 = vmatpush2.bf16.msra.mxu0 %v1552
    %1596 = vmatprep.subr.bf16.mxu0 0
    %1597 = vmatpush2.bf16.msra.mxu0 %v1551
    %1598 = vmatprep.subr.bf16.mxu0 0
    %1599 = vmatpush2.bf16.msra.mxu0 %v1550
    %1600 = vmatprep.subr.bf16.mxu0 0
    %1601 = vmatpush2.bf16.msra.mxu0 %v1549
    %1602 = vmatprep.subr.bf16.mxu0 0
    %1603 = vmatpush2.bf16.msra.mxu0 %v1548
    %1604 = vmatprep.mubr.bf16.mxu0 %v1436
    %1605 = vmatmul.mubr.bf16.gmra.mxu0 %v1435
    %v1606 = vpop.f32.mrf.mxu0
    %v1607 = vadd.f32 %v1474, %v1606
    %v1608 = vpop.f32.mrf.mxu0
    %v1609 = vpop.f32.mrf.mxu0
    %v1610 = vpop.f32.mrf.mxu0
    %1611 = vdwg.mxu0
    %v1612 = vmax.f32 %v1607, 0.0
    %v1613 = vpack.c.bf16 %v1612, %v1612
    %v1614 = vld [vmem:[#allocation11] sm:$0xf]
    %v1615 = vld [vmem:[#allocation11 + $0x4] sm:$0xf]
    %v1616 = vld [vmem:[#allocation11 + $0x8] sm:$0xf]
    %v1617 = vld [vmem:[#allocation11 + $0xc] sm:$0xf]
    %v1618 = vld [vmem:[#allocation11 + $0x10] sm:$0xf]
    %v1619 = vld [vmem:[#allocation11 + $0x14] sm:$0xf]
    %v1620 = vld [vmem:[#allocation11 + $0x18] sm:$0xf]
    %v1621 = vld [vmem:[#allocation11 + $0x1c] sm:$0xf]
    %v1622 = vld [vmem:[#allocation11 + $0x20] sm:$0xf]
    %v1623 = vld [vmem:[#allocation11 + $0x24] sm:$0xf]
    %v1624 = vld [vmem:[#allocation11 + $0x28] sm:$0xf]
    %v1625 = vld [vmem:[#allocation11 + $0x2c] sm:$0xf]
    %v1626 = vld [vmem:[#allocation11 + $0x30] sm:$0xf]
    %v1627 = vld [vmem:[#allocation11 + $0x34] sm:$0xf]
    %v1628 = vld [vmem:[#allocation11 + $0x38] sm:$0xf]
    %v1629 = vld [vmem:[#allocation11 + $0x3c] sm:$0xf]
    %v1630 = vld [vmem:[%s11] sm:$0x1]
    %v1632 = vlaneseq
    %v1633 = vshrl.u32 %v1632, 7
    %v1634 = vsub.s32 0, %v1633
    %v1635 = vrot.slane %v1630, %v1634
    %v1653 = vunpack.c.l.b16 %v1614
    %v1654 = vunpack.c.l.b16 %v1615
    %v1655 = vunpack.c.l.b16 %v1616
    %v1656 = vunpack.c.l.b16 %v1617
    %v1657 = vunpack.c.l.b16 %v1618
    %v1658 = vunpack.c.l.b16 %v1619
    %v1659 = vunpack.c.l.b16 %v1620
    %v1660 = vunpack.c.l.b16 %v1621
    %v1661 = vunpack.c.l.b16 %v1622
    %v1662 = vunpack.c.l.b16 %v1623
    %v1663 = vunpack.c.l.b16 %v1624
    %v1664 = vunpack.c.l.b16 %v1625
    %v1665 = vunpack.c.l.b16 %v1626
    %v1666 = vunpack.c.l.b16 %v1627
    %v1667 = vunpack.c.l.b16 %v1628
    %v1668 = vunpack.c.l.b16 %v1629
    %v1669 = vpack.c.b16 %v1654, %v1653
    %v1670 = vpack.c.b16 %v1656, %v1655
    %v1671 = vpack.c.b16 %v1658, %v1657
    %v1672 = vpack.c.b16 %v1660, %v1659
    %v1673 = vpack.c.b16 %v1662, %v1661
    %v1674 = vpack.c.b16 %v1664, %v1663
    %v1675 = vpack.c.b16 %v1666, %v1665
    %v1676 = vpack.c.b16 %v1668, %v1667
    %1685 = vmatprep.subr.bf16.mxu0 0
    %1686 = vmatpush1.bf16.msra.mxu0 %v1676
    %1687 = vmatprep.subr.bf16.mxu0 0
    %1688 = vmatpush1.bf16.msra.mxu0 %v1675
    %1689 = vmatprep.subr.bf16.mxu0 0
    %1690 = vmatpush1.bf16.msra.mxu0 %v1674
    %1691 = vmatprep.subr.bf16.mxu0 0
    %1692 = vmatpush1.bf16.msra.mxu0 %v1673
    %1693 = vmatprep.subr.bf16.mxu0 0
    %1694 = vmatpush1.bf16.msra.mxu0 %v1672
    %1695 = vmatprep.subr.bf16.mxu0 0
    %1696 = vmatpush1.bf16.msra.mxu0 %v1671
    %1697 = vmatprep.subr.bf16.mxu0 0
    %1698 = vmatpush1.bf16.msra.mxu0 %v1670
    %1699 = vmatprep.subr.bf16.mxu0 0
    %1700 = vmatpush1.bf16.msra.mxu0 %v1669
    %1701 = vmatprep.subr.bf16.mxu0 0
    %1702 = vmatpush2.bf16.msra.mxu0 0
    %1703 = vmatprep.subr.bf16.mxu0 0
    %1704 = vmatpush2.bf16.msra.mxu0 0
    %1705 = vmatprep.subr.bf16.mxu0 0
    %1706 = vmatpush2.bf16.msra.mxu0 0
    %1707 = vmatprep.subr.bf16.mxu0 0
    %1708 = vmatpush2.bf16.msra.mxu0 0
    %1709 = vmatprep.subr.bf16.mxu0 0
    %1710 = vmatpush2.bf16.msra.mxu0 0
    %1711 = vmatprep.subr.bf16.mxu0 0
    %1712 = vmatpush2.bf16.msra.mxu0 0
    %1713 = vmatprep.subr.bf16.mxu0 0
    %1714 = vmatpush2.bf16.msra.mxu0 0
    %1715 = vmatprep.subr.bf16.mxu0 0
    %1716 = vmatpush2.bf16.msra.mxu0 0
    %1717 = vmatprep.mubr.bf16.mxu0 0
    %1718 = vmatmul.mubr.bf16.gmra.mxu0 %v1613
    %v1719 = vpop.f32.mrf.mxu0
    %v1720 = vadd.f32 %v1635, %v1719
    %v1721 = vpop.f32.mrf.mxu0
    %v1722 = vpop.f32.mrf.mxu0
    %v1723 = vpop.f32.mrf.mxu0
    %1724 = vdwg.mxu0
    %v1725 = vmax.f32 %v1720, 0.0
    %v1726 = vpack.c.bf16 %v1725, %v1725
    %v1727 = vld [vmem:[#allocation13] sm:$0xf]
    %v1728 = vld [vmem:[#allocation13 + $0x4] sm:$0xf]
    %v1729 = vld [vmem:[#allocation13 + $0x8] sm:$0xf]
    %v1730 = vld [vmem:[#allocation13 + $0xc] sm:$0xf]
    %v1731 = vld [vmem:[#allocation13 + $0x10] sm:$0xf]
    %v1732 = vld [vmem:[#allocation13 + $0x14] sm:$0xf]
    %v1733 = vld [vmem:[#allocation13 + $0x18] sm:$0xf]
    %v1734 = vld [vmem:[#allocation13 + $0x1c] sm:$0xf]
    %v1735 = vld [vmem:[#allocation13 + $0x20] sm:$0xf]
    %v1736 = vld [vmem:[#allocation13 + $0x24] sm:$0xf]
    %v1737 = vld [vmem:[#allocation13 + $0x28] sm:$0xf]
    %v1738 = vld [vmem:[#allocation13 + $0x2c] sm:$0xf]
    %v1739 = vld [vmem:[#allocation13 + $0x30] sm:$0xf]
    %v1740 = vld [vmem:[#allocation13 + $0x34] sm:$0xf]
    %v1741 = vld [vmem:[#allocation13 + $0x38] sm:$0xf]
    %v1742 = vld [vmem:[#allocation13 + $0x3c] sm:$0xf]
    %v1743 = vld [vmem:[%s12] sm:$0x1]
    %v1745 = vlaneseq
    %v1746 = vshrl.u32 %v1745, 7
    %v1747 = vsub.s32 0, %v1746
    %v1748 = vrot.slane %v1743, %v1747
    %v1766 = vunpack.c.l.b16 %v1727
    %v1767 = vunpack.c.l.b16 %v1728
    %v1768 = vunpack.c.l.b16 %v1729
    %v1769 = vunpack.c.l.b16 %v1730
    %v1770 = vunpack.c.l.b16 %v1731
    %v1771 = vunpack.c.l.b16 %v1732
    %v1772 = vunpack.c.l.b16 %v1733
    %v1773 = vunpack.c.l.b16 %v1734
    %v1774 = vunpack.c.l.b16 %v1735
    %v1775 = vunpack.c.l.b16 %v1736
    %v1776 = vunpack.c.l.b16 %v1737
    %v1777 = vunpack.c.l.b16 %v1738
    %v1778 = vunpack.c.l.b16 %v1739
    %v1779 = vunpack.c.l.b16 %v1740
    %v1780 = vunpack.c.l.b16 %v1741
    %v1781 = vunpack.c.l.b16 %v1742
    %v1782 = vpack.c.b16 %v1767, %v1766
    %v1783 = vpack.c.b16 %v1769, %v1768
    %v1784 = vpack.c.b16 %v1771, %v1770
    %v1785 = vpack.c.b16 %v1773, %v1772
    %v1786 = vpack.c.b16 %v1775, %v1774
    %v1787 = vpack.c.b16 %v1777, %v1776
    %v1788 = vpack.c.b16 %v1779, %v1778
    %v1789 = vpack.c.b16 %v1781, %v1780
    %1798 = vmatprep.subr.bf16.mxu0 0
    %1799 = vmatpush1.bf16.msra.mxu0 %v1789
    %1800 = vmatprep.subr.bf16.mxu0 0
    %1801 = vmatpush1.bf16.msra.mxu0 %v1788
    %1802 = vmatprep.subr.bf16.mxu0 0
    %1803 = vmatpush1.bf16.msra.mxu0 %v1787
    %1804 = vmatprep.subr.bf16.mxu0 0
    %1805 = vmatpush1.bf16.msra.mxu0 %v1786
    %1806 = vmatprep.subr.bf16.mxu0 0
    %1807 = vmatpush1.bf16.msra.mxu0 %v1785
    %1808 = vmatprep.subr.bf16.mxu0 0
    %1809 = vmatpush1.bf16.msra.mxu0 %v1784
    %1810 = vmatprep.subr.bf16.mxu0 0
    %1811 = vmatpush1.bf16.msra.mxu0 %v1783
    %1812 = vmatprep.subr.bf16.mxu0 0
    %1813 = vmatpush1.bf16.msra.mxu0 %v1782
    %1814 = vmatprep.subr.bf16.mxu0 0
    %1815 = vmatpush2.bf16.msra.mxu0 0
    %1816 = vmatprep.subr.bf16.mxu0 0
    %1817 = vmatpush2.bf16.msra.mxu0 0
    %1818 = vmatprep.subr.bf16.mxu0 0
    %1819 = vmatpush2.bf16.msra.mxu0 0
    %1820 = vmatprep.subr.bf16.mxu0 0
    %1821 = vmatpush2.bf16.msra.mxu0 0
    %1822 = vmatprep.subr.bf16.mxu0 0
    %1823 = vmatpush2.bf16.msra.mxu0 0
    %1824 = vmatprep.subr.bf16.mxu0 0
    %1825 = vmatpush2.bf16.msra.mxu0 0
    %1826 = vmatprep.subr.bf16.mxu0 0
    %1827 = vmatpush2.bf16.msra.mxu0 0
    %1828 = vmatprep.subr.bf16.mxu0 0
    %1829 = vmatpush2.bf16.msra.mxu0 0
    %1830 = vmatprep.mubr.bf16.mxu0 0
    %1831 = vmatmul.mubr.bf16.gmra.mxu0 %v1726
    %v1832 = vpop.f32.mrf.mxu0
    %v1833 = vadd.f32 %v1748, %v1832
    %v1834 = vpop.f32.mrf.mxu0
    %v1835 = vpop.f32.mrf.mxu0
    %v1836 = vpop.f32.mrf.mxu0
    %1837 = vdwg.mxu0
    %1838 = vst [vmem:[#allocation14] sm:$0xff] %v1833
    // Predicated region
    $region82: #{tpu_custom_call.1} parent=1 // pred_check
      _
    $region83: #{tpu_custom_call.1} parent=1 // pred_check_branch
      %1840 = sbr.rel (0) target = $region85
    $region84: #{tpu_custom_call.1} parent=1 // pred_region
      %s1842 = ssub.s32 128, 128
      %1843 = vsyncadd [#allocation4], %s1842
      %s1845 = sshll.u32 [#allocation14], 4
      %s1846 = int_to_ptr.vmem [resolvable:$true] %s1845
      %1848 = dma.vmem_to_hbm [thread:$0]  %s1846, 128, %s13, [#allocation4]
    $region85: #{tpu_custom_call.1} parent=1 // pred_fallthru
      _
    // Predicated region
    $region86: #{tpu_custom_call.1} parent=1 // pred_check
      _
    $region87: #{tpu_custom_call.1} parent=1 // pred_check_branch
      %1850 = sbr.rel (0) target = $region89
    $region88: #{tpu_custom_call.1} parent=1 // pred_region
      %1851 = dma.done [#allocation4], 128
    $region89: #{tpu_custom_call.1} parent=1 // pred_fallthru
      _
    %1852 = vsyncpa [#allocation3], 1
    %1853 = vsyncpa [#allocation6], 1
    %1854 = vsyncpa [#allocation9], 1
    %1855 = vsyncpa [#allocation12], 1
    %1856 = vsyncpa [#allocation4], 1

</llo_original>
